<compile_context>
chip_gen: v5e
topology: v5e:2x2
jax: 0.10.0
libtpu: 0.0.40
codegen_flags: <defaults>
</compile_context>

<pallas_src>
import functools
import math

import jax
import jax.numpy as jnp
import numpy as np
from jax.experimental import pallas as pl
from jax.experimental.pallas import tpu as pltpu

EPS = 1e-5  # PyTorch BatchNorm3d default


def _vmem_capacity_bytes():
    try:
        return int(pltpu.get_tpu_info().vmem_capacity_bytes)
    except Exception:
        return 64 << 20  # conservative default (v7x per-TensorCore VMEM)


def _plan_pass1(N, Cin, Cout, D, H, W, requested, in_bytes, c_bytes, y_bytes,
                vmem_cap):
    """Pick the depth tile (chunk = tD planes) and the halo block plane count."""
    S = H * W
    hP = 128 // math.gcd(S, 128)          # planes per 128-aligned halo block

    def tile_ok(t):
        return D % t == 0 and (t == D or (t * S) % 128 == 0)

    def halo(t):
        del t
        return hP if D % hP == 0 else D   # D % hP != 0 only possible when T == 1

    def ws_bytes(t):
        tC = t * S
        hB = halo(t)
        b = 2 * Cin * tC * in_bytes                  # chunk input (2x buffered)
        b += 4 * Cin * hB * S * in_bytes             # halo planes (2x buffered)
        b += Cin * (tC + 2 * S + 512) * c_bytes      # staged window scratch
        b += 9 * Cin * tC * c_bytes                  # per-group patches scratch
        b += 2 * Cin * tC * c_bytes                  # in-flight tap temporaries
        b += 2 * Cout * tC * 4                       # f32 accumulator + matmul out
        b += 2 * Cout * tC * y_bytes                 # y output (2x buffered)
        b += 6 * tC * 4 + 54 * Cout * Cin * c_bytes + (1 << 20)
        return b

    if requested is not None and tile_ok(requested):
        return requested, halo(requested), ws_bytes(requested)

    budget = max(int(vmem_cap * 0.45), 24 << 20)
    cand = [t for t in range(1, D + 1) if tile_ok(t)]
    fits = [t for t in cand if ws_bytes(t) <= budget]
    pool = fits if fits else cand[:1]
    if N < 2:
        multi = [t for t in pool if D // t >= 2]     # keep >= 2 grid steps (v7x)
        if multi:
            pool = multi
    tD = None
    for t in sorted(pool):
        if t * S >= 16 * 1024:                       # amortize per-step overhead
            tD = t
            break
    if tD is None:
        tD = max(pool)
    return tD, halo(tD), ws_bytes(tD)


def _make_conv_stats_kernel(Cin, Cout, D, H, W, tD, hB, compute_dtype):
    """Conv3d(3x3x3, pad=1) via 3 accumulating K=9*Cin matmuls + BN partials."""
    S = H * W
    tC = tD * S

    # Staged window layout: [zero slop | prev plane | chunk | next plane | slop].
    zL = (-S) % 128
    while zL < W + 1:
        zL += 128                          # chunk start lane-aligned, slop >= W+1
    zR = W + 1
    zR += (-(zL + 2 * S + tC + zR)) % 128
    Q = zL + S                             # chunk offset inside the window
    EW = zL + 2 * S + tC + zR

    hw_taps = [(kh, kw) for kh in range(3) for kw in range(3)]
    cdt = compute_dtype

    def kernel(pos_ref, xprev_ref, xcur_ref, xnext_ref, w_ref,
               y_ref, sum_ref, ssq_ref, ext_ref, patches_ref):
        t = pl.program_id(1)
        w_idx = pos_ref[0:1, :]
        h_idx = pos_ref[1:2, :]
        d_idx = pos_ref[2:3, :] + t * tD            # global depth index

        # Boundary masks, built once per grid step and reused by every tap.
        mw = {0: w_idx >= 1, 2: w_idx <= W - 2}
        mh = {0: h_idx >= 1, 2: h_idx <= H - 2}
        md = {0: d_idx >= 1, 2: d_idx <= D - 2}
        hw_mask = {}
        for kh, kw in hw_taps:
            m = None
            if kh != 1:
                m = mh[kh]
            if kw != 1:
                m = mw[kw] if m is None else jnp.logical_and(m, mw[kw])
            hw_mask[(kh, kw)] = m

        # Stage the window once, in the compute dtype (bf16 fast path), directly
        # into a VMEM scratch.  The slop regions are only read behind false masks.
        ext_ref[:, 0:zL] = jnp.zeros((Cin, zL), cdt)
        ext_ref[:, zL:zL + S] = xprev_ref[:, (hB - 1) * S:hB * S].astype(cdt)
        ext_ref[:, Q:Q + tC] = xcur_ref[...].astype(cdt)
        ext_ref[:, Q + tC:Q + tC + S] = xnext_ref[:, 0:S].astype(cdt)
        ext_ref[:, Q + tC + S:EW] = jnp.zeros((Cin, zR), cdt)

        acc = None
        for kd in range(3):
            for j, (kh, kw) in enumerate(hw_taps):
                rows = slice(j * Cin, (j + 1) * Cin)
                dead = ((D == 1 and kd != 1) or (H == 1 and kh != 1)
                        or (W == 1 and kw != 1))
                if dead:   # tap can never be in bounds for this degenerate shape
                    patches_ref[rows, :] = jnp.zeros((Cin, tC), cdt)
                    continue
                off = (kd - 1) * S + (kh - 1) * W + (kw - 1)
                patch = ext_ref[:, Q + off:Q + off + tC]
                ok = hw_mask[(kh, kw)]
                if kd != 1:
                    ok = md[kd] if ok is None else jnp.logical_and(ok, md[kd])
                if ok is not None:
                    patch = jnp.where(ok, patch, jnp.zeros_like(patch))
                patches_ref[rows, :] = patch
            part = jnp.dot(w_ref[kd], patches_ref[...],
                           preferred_element_type=jnp.float32)   # (Cout, tC) f32
            acc = part if acc is None else acc + part

        y_ref[...] = acc.astype(y_ref.dtype)
        sum_ref[...] = jnp.sum(acc, axis=1)[None, :]              # (1, Cout)
        ssq_ref[...] = jnp.sum(acc * acc, axis=1)[None, :]

    return kernel, EW


def _bn_relu_kernel(y_ref, scale_ref, shift_ref, o_ref):
    y = y_ref[...].astype(jnp.float32)
    o_ref[...] = jnp.maximum(y * scale_ref[...] + shift_ref[...], 0.0)


def _pass2_tiles(R, C):
    """Large lane-dense blocks (~0.5M elements) that evenly tile (R, C)."""
    if C % 128 == 0:
        tc = 128
        for cand in range(min(C, 32768), 127, -128):
            if C % cand == 0:
                tc = cand
                break
    else:
        tc = C
    if R % 8 == 0:
        tr = 8
        for cand in range(R, 7, -8):
            if R % cand == 0 and cand * tc <= 512 * 1024:
                tr = cand
                break
    else:
        tr = R
    return tr, tc


@functools.partial(jax.jit,
                   static_argnames=("eps", "compute_dtype", "depth_tile"))
def conv_bn_relu_3d(x_ncdhw, weight_oidhw, gamma, beta, eps=EPS,
                    compute_dtype=jnp.bfloat16, depth_tile=None):
    """Forward pass of ConvBnReLU3D (training-mode BatchNorm statistics)."""
    N, Cin, D, H, W = x_ncdhw.shape
    Cout = weight_oidhw.shape[0]
    S = H * W

    in_bytes = jnp.dtype(x_ncdhw.dtype).itemsize
    c_bytes = jnp.dtype(compute_dtype).itemsize
    # pass-1 storage: bf16 on the fast path, f32 for exact-parity runs.
    y_dtype = (jnp.bfloat16
               if jnp.dtype(compute_dtype) == jnp.dtype(jnp.bfloat16)
               else jnp.float32)
    y_bytes = jnp.dtype(y_dtype).itemsize

    vmem_cap = _vmem_capacity_bytes()
    tD, hB, ws = _plan_pass1(N, Cin, Cout, D, H, W, depth_tile,
                             in_bytes, c_bytes, y_bytes, vmem_cap)
    T = D // tD
    tC = tD * S
    tDb = tD // hB
    DhB = D // hB
    vmem_limit = int(min(max(ws + (16 << 20), 48 << 20), vmem_cap - (4 << 20)))
    vmem_limit = max(vmem_limit, 16 << 20)

    # Native-layout flat view; the bf16 cast happens in-kernel, after the DMA.
    x3 = x_ncdhw.reshape(N, Cin, D * S)
    # (kd, Cout, kh*kw*Cin) weight layout matching the per-group patch rows.
    w3 = (jnp.transpose(weight_oidhw, (0, 2, 3, 4, 1))
          .reshape(Cout, 3, 9 * Cin).transpose(1, 0, 2).astype(compute_dtype))

    # Static per-position (w, h, local depth) indices for the boundary masks.
    p = np.arange(tC)
    pos = jnp.asarray(
        np.stack([p % W, (p // W) % H, p // S]).astype(np.int32))   # (3, tC)

    kernel, EW = _make_conv_stats_kernel(Cin, Cout, D, H, W, tD, hB,
                                         compute_dtype)

    # Pass 1: conv (3 accumulating K=9*Cin matmuls per chunk) + BN partial sums.
    y, psum, pssq = pl.pallas_call(
        kernel,
        out_shape=(
            jax.ShapeDtypeStruct((N, Cout, D * S), y_dtype),
            jax.ShapeDtypeStruct((N, T, 1, Cout), jnp.float32),
            jax.ShapeDtypeStruct((N, T, 1, Cout), jnp.float32),
        ),
        grid_spec=pltpu.PrefetchScalarGridSpec(
            num_scalar_prefetch=0,
            grid=(N, T),
            in_specs=[
                pl.BlockSpec((3, tC), lambda n, t: (0, 0)),
                pl.BlockSpec((None, Cin, hB * S),
                             lambda n, t: (n, 0, jnp.maximum(t * tDb - 1, 0))),
                pl.BlockSpec((None, Cin, tC), lambda n, t: (n, 0, t)),
                pl.BlockSpec((None, Cin, hB * S),
                             lambda n, t: (n, 0,
                                           jnp.minimum((t + 1) * tDb, DhB - 1))),
                pl.BlockSpec((3, Cout, 9 * Cin), lambda n, t: (0, 0, 0)),
            ],
            out_specs=[
                pl.BlockSpec((None, Cout, tC), lambda n, t: (n, 0, t)),
                pl.BlockSpec((None, None, 1, Cout), lambda n, t: (n, t, 0, 0)),
                pl.BlockSpec((None, None, 1, Cout), lambda n, t: (n, t, 0, 0)),
            ],
            scratch_shapes=[
                pltpu.VMEM((Cin, EW), compute_dtype),       # staged window
                pltpu.VMEM((9 * Cin, tC), compute_dtype),   # per-group patches
            ],
        ),
        compiler_params=pltpu.CompilerParams(
            dimension_semantics=("parallel", "parallel"),
            vmem_limit_bytes=vmem_limit),
    )(pos, x3, x3, x3, w3)

    # Finalize BatchNorm statistics (tiny per-channel math; biased variance as
    # in PyTorch's normalization path).
    cnt = float(N * D * S)
    mean = jnp.sum(psum, axis=(0, 1, 2)) / cnt
    var = jnp.sum(pssq, axis=(0, 1, 2)) / cnt - mean * mean
    scale = gamma.astype(jnp.float32) * jax.lax.rsqrt(var + eps)
    shift = beta.astype(jnp.float32) - mean * scale

    # Pass 2: y * scale + shift, ReLU -- large lane-dense 2-D blocks.
    R, C = N * Cout, D * S
    y2 = y.reshape(R, C)
    scale_rows = jnp.tile(scale, N).reshape(R, 1)
    shift_rows = jnp.tile(shift, N).reshape(R, 1)
    tR, tc2 = _pass2_tiles(R, C)
    alias = ({0: 0} if jnp.dtype(y_dtype) == jnp.dtype(jnp.float32) else {})

    out2 = pl.pallas_call(
        _bn_relu_kernel,
        out_shape=jax.ShapeDtypeStruct((R, C), jnp.float32),
        grid_spec=pltpu.PrefetchScalarGridSpec(
            num_scalar_prefetch=0,
            grid=(R // tR, C // tc2),
            in_specs=[
                pl.BlockSpec((tR, tc2), lambda i, j: (i, j)),
                pl.BlockSpec((tR, 1), lambda i, j: (i, 0)),
                pl.BlockSpec((tR, 1), lambda i, j: (i, 0)),
            ],
            out_specs=pl.BlockSpec((tR, tc2), lambda i, j: (i, j)),
        ),
        compiler_params=pltpu.CompilerParams(
            dimension_semantics=("parallel", "parallel"),
            vmem_limit_bytes=int(min(vmem_cap * 3 // 4, 64 << 20))),
        input_output_aliases=alias,
    )(y2, scale_rows, shift_rows)

    return out2.reshape(N, Cout, D, H, W)


def _reference(x_ncdhw, weight_oidhw, gamma, beta, eps=EPS):
    y = jax.lax.conv_general_dilated(
        x_ncdhw, weight_oidhw, window_strides=(1, 1, 1),
        padding=((1, 1), (1, 1), (1, 1)),
        dimension_numbers=("NCDHW", "OIDHW", "NCDHW"))
    mean = jnp.mean(y, axis=(0, 2, 3, 4))
    var = jnp.var(y, axis=(0, 2, 3, 4))
    yn = (y - mean[None, :, None, None, None]) * jax.lax.rsqrt(
        var + eps)[None, :, None, None, None]
    yn = yn * gamma[None, :, None, None, None] + beta[None, :, None, None, None]
    return jnp.maximum(yn, 0.0)


if __name__ == "__main__":
    # Small shapes: batch=2, in_channels=8, out_channels=16, D=H=W=8.
    N, Cin, Cout, D, H, W = 2, 8, 16, 8, 8, 8

    key = jax.random.PRNGKey(0)
    kx, kw_, kg, kb = jax.random.split(key, 4)
    x = jax.random.normal(kx, (N, Cin, D, H, W), jnp.float32)          # NCDHW
    weight = 0.1 * jax.random.normal(kw_, (Cout, Cin, 3, 3, 3), jnp.float32)
    gamma = 1.0 + 0.1 * jax.random.normal(kg, (Cout,), jnp.float32)
    beta = 0.1 * jax.random.normal(kb, (Cout,), jnp.float32)

    ref = jax.block_until_ready(_reference(x, weight, gamma, beta))

    # f32 compute + f32 storage: exact-parity path; depth_tile=2 exercises the
    # multi-chunk thin-halo logic (grid = (N, D // 2) = (2, 4)).
    out = jax.block_until_ready(
        conv_bn_relu_3d(x, weight, gamma, beta,
                        compute_dtype=jnp.float32, depth_tile=2))
    assert out.shape == (N, Cout, D, H, W), out.shape
    assert np.allclose(np.asarray(out), np.asarray(ref), rtol=5e-3, atol=5e-3)

    # Default fast path: bf16 MXU operands + bf16 intermediate storage, auto
    # depth tiling.
    out_bf16 = jax.block_until_ready(conv_bn_relu_3d(x, weight, gamma, beta))
    assert out_bf16.shape == (N, Cout, D, H, W)
    assert np.allclose(np.asarray(out_bf16), np.asarray(ref),
                       rtol=4e-2, atol=4e-2)

    print("KERNEL_OK")
</pallas_src>

<mosaic_0001>
module attributes {stable_mosaic.version = 11 : i64} {
  func.func @kernel(%arg0: i32, %arg1: i32, %arg2: memref<3x128xi32, #tpu.memory_space<vmem>>, %arg3: memref<1x8x128xf32, #tpu.memory_space<vmem>>, %arg4: memref<1x8x128xf32, #tpu.memory_space<vmem>>, %arg5: memref<1x8x128xf32, #tpu.memory_space<vmem>>, %arg6: memref<3x16x72xf32, #tpu.memory_space<vmem>>, %arg7: memref<1x16x128xf32, #tpu.memory_space<vmem>>, %arg8: memref<1x1x1x16xf32, #tpu.memory_space<vmem>>, %arg9: memref<1x1x1x16xf32, #tpu.memory_space<vmem>>, %arg10: memref<8x384xf32, #tpu.memory_space<vmem>>, %arg11: memref<72x128xf32, #tpu.memory_space<vmem>>) attributes {dimension_semantics = [#tpu.dimension_semantics<parallel>, #tpu.dimension_semantics<parallel>], iteration_bounds = array<i64: 2, 4>, scalar_prefetch = 0 : i64, scratch_operands = 2 : i64, tpu.core_type = #tpu.core_type<tc>, window_params = [{pipeline_mode = #tpu.pipeline_mode<synchronous>, transform_indices = @transform_0, window_bounds = array<i64: 3, 128>}, {transform_indices = @transform_1, window_bounds = array<i64: 1, 8, 128>}, {transform_indices = @transform_2, window_bounds = array<i64: 1, 8, 128>}, {transform_indices = @transform_3, window_bounds = array<i64: 1, 8, 128>}, {pipeline_mode = #tpu.pipeline_mode<synchronous>, transform_indices = @transform_4, window_bounds = array<i64: 3, 16, 72>}, {transform_indices = @transform_5, window_bounds = array<i64: 1, 16, 128>}, {transform_indices = @transform_6, window_bounds = array<i64: 1, 1, 1, 16>}, {transform_indices = @transform_7, window_bounds = array<i64: 1, 1, 1, 16>}]} {
    %c0 = arith.constant 0 : index
    %c0_0 = arith.constant 0 : index
    %0 = vector.load %arg2[%c0, %c0_0] : memref<3x128xi32, #tpu.memory_space<vmem>>, vector<1x128xi32>
    %c1 = arith.constant 1 : index
    %c0_1 = arith.constant 0 : index
    %1 = vector.load %arg2[%c1, %c0_1] : memref<3x128xi32, #tpu.memory_space<vmem>>, vector<1x128xi32>
    %c2 = arith.constant 2 : index
    %c0_2 = arith.constant 0 : index
    %2 = vector.load %arg2[%c2, %c0_2] : memref<3x128xi32, #tpu.memory_space<vmem>>, vector<1x128xi32>
    %c2_i32 = arith.constant 2 : i32
    %3 = arith.muli %arg1, %c2_i32 : i32
    %4 = vector.broadcast %3 : i32 to vector<1x128xi32>
    %5 = arith.addi %2, %4 : vector<1x128xi32>
    %c1_i32 = arith.constant 1 : i32
    %6 = vector.broadcast %c1_i32 : i32 to vector<1x128xi32>
    %7 = arith.cmpi sge, %0, %6 : vector<1x128xi32>
    %c6_i32 = arith.constant 6 : i32
    %8 = vector.broadcast %c6_i32 : i32 to vector<1x128xi32>
    %9 = arith.cmpi sle, %0, %8 : vector<1x128xi32>
    %c1_i32_3 = arith.constant 1 : i32
    %10 = vector.broadcast %c1_i32_3 : i32 to vector<1x128xi32>
    %11 = arith.cmpi sge, %1, %10 : vector<1x128xi32>
    %c6_i32_4 = arith.constant 6 : i32
    %12 = vector.broadcast %c6_i32_4 : i32 to vector<1x128xi32>
    %13 = arith.cmpi sle, %1, %12 : vector<1x128xi32>
    %c1_i32_5 = arith.constant 1 : i32
    %14 = vector.broadcast %c1_i32_5 : i32 to vector<1x128xi32>
    %15 = arith.cmpi sge, %5, %14 : vector<1x128xi32>
    %c6_i32_6 = arith.constant 6 : i32
    %16 = vector.broadcast %c6_i32_6 : i32 to vector<1x128xi32>
    %17 = arith.cmpi sle, %5, %16 : vector<1x128xi32>
    %18 = arith.andi %11, %7 : vector<1x128xi1>
    %19 = arith.andi %11, %9 : vector<1x128xi1>
    %20 = arith.andi %13, %7 : vector<1x128xi1>
    %21 = arith.andi %13, %9 : vector<1x128xi1>
    %cst = arith.constant 0.000000e+00 : f32
    %22 = vector.broadcast %cst : f32 to vector<8x64xf32>
    %c0_7 = arith.constant 0 : index
    %c0_8 = arith.constant 0 : index
    %23 = vector.load %arg10[%c0_7, %c0_8] : memref<8x384xf32, #tpu.memory_space<vmem>>, vector<8x64xf32>
    tpu.vector_store %arg10[%c0_7, %c0_8], %22 {strides = array<i32>} : memref<8x384xf32, #tpu.memory_space<vmem>>, vector<8x64xf32>,
    %c0_9 = arith.constant 0 : index
    %c0_10 = arith.constant 0 : index
    %c64 = arith.constant 64 : index
    %24 = vector.load %arg3[%c0_9, %c0_10, %c64] : memref<1x8x128xf32, #tpu.memory_space<vmem>>, vector<1x8x64xf32>
    %25 = vector.shape_cast %24 : vector<1x8x64xf32> to vector<8x64xf32>
    %c0_11 = arith.constant 0 : index
    %c64_12 = arith.constant 64 : index
    %26 = vector.load %arg10[%c0_11, %c64_12] : memref<8x384xf32, #tpu.memory_space<vmem>>, vector<8x64xf32>
    tpu.vector_store %arg10[%c0_11, %c64_12], %25 {strides = array<i32>} : memref<8x384xf32, #tpu.memory_space<vmem>>, vector<8x64xf32>,
    %c0_13 = arith.constant 0 : index
    %c0_14 = arith.constant 0 : index
    %c0_15 = arith.constant 0 : index
    %27 = vector.load %arg4[%c0_13, %c0_14, %c0_15] : memref<1x8x128xf32, #tpu.memory_space<vmem>>, vector<1x8x128xf32>
    %28 = vector.shape_cast %27 : vector<1x8x128xf32> to vector<8x128xf32>
    %c0_16 = arith.constant 0 : index
    %c128 = arith.constant 128 : index
    %29 = vector.load %arg10[%c0_16, %c128] : memref<8x384xf32, #tpu.memory_space<vmem>>, vector<8x128xf32>
    tpu.vector_store %arg10[%c0_16, %c128], %28 {strides = array<i32>} : memref<8x384xf32, #tpu.memory_space<vmem>>, vector<8x128xf32>,
    %c0_17 = arith.constant 0 : index
    %c0_18 = arith.constant 0 : index
    %c0_19 = arith.constant 0 : index
    %30 = vector.load %arg5[%c0_17, %c0_18, %c0_19] : memref<1x8x128xf32, #tpu.memory_space<vmem>>, vector<1x8x64xf32>
    %31 = vector.shape_cast %30 : vector<1x8x64xf32> to vector<8x64xf32>
    %c0_20 = arith.constant 0 : index
    %c256 = arith.constant 256 : index
    %32 = vector.load %arg10[%c0_20, %c256] : memref<8x384xf32, #tpu.memory_space<vmem>>, vector<8x64xf32>
    tpu.vector_store %arg10[%c0_20, %c256], %31 {strides = array<i32>} : memref<8x384xf32, #tpu.memory_space<vmem>>, vector<8x64xf32>,
    %cst_21 = arith.constant 0.000000e+00 : f32
    %33 = vector.broadcast %cst_21 : f32 to vector<8x64xf32>
    %c0_22 = arith.constant 0 : index
    %c320 = arith.constant 320 : index
    %34 = vector.load %arg10[%c0_22, %c320] : memref<8x384xf32, #tpu.memory_space<vmem>>, vector<8x64xf32>
    tpu.vector_store %arg10[%c0_22, %c320], %33 {strides = array<i32>} : memref<8x384xf32, #tpu.memory_space<vmem>>, vector<8x64xf32>,
    %c0_23 = arith.constant 0 : index
    %c55 = arith.constant 55 : index
    %35 = vector.load %arg10[%c0_23, %c55] : memref<8x384xf32, #tpu.memory_space<vmem>>, vector<8x128xf32>
    %36 = arith.andi %18, %15 : vector<1x128xi1>
    %cst_24 = arith.constant 0.000000e+00 : f32
    %37 = vector.broadcast %cst_24 : f32 to vector<8x128xf32>
    %38 = vector.shape_cast %36 : vector<1x128xi1> to vector<1x128xi1>
    %39 = vector.broadcast %38 : vector<1x128xi1> to vector<8x128xi1>
    %40 = arith.select %39, %35, %37 : vector<8x128xi1>, vector<8x128xf32>
    %c0_25 = arith.constant 0 : index
    %c0_26 = arith.constant 0 : index
    %41 = vector.load %arg11[%c0_25, %c0_26] : memref<72x128xf32, #tpu.memory_space<vmem>>, vector<8x128xf32>
    tpu.vector_store %arg11[%c0_25, %c0_26], %40 {strides = array<i32>} : memref<72x128xf32, #tpu.memory_space<vmem>>, vector<8x128xf32>,
    %c0_27 = arith.constant 0 : index
    %c56 = arith.constant 56 : index
    %42 = vector.load %arg10[%c0_27, %c56] : memref<8x384xf32, #tpu.memory_space<vmem>>, vector<8x128xf32>
    %43 = arith.andi %11, %15 : vector<1x128xi1>
    %cst_28 = arith.constant 0.000000e+00 : f32
    %44 = vector.broadcast %cst_28 : f32 to vector<8x128xf32>
    %45 = vector.shape_cast %43 : vector<1x128xi1> to vector<1x128xi1>
    %46 = vector.broadcast %45 : vector<1x128xi1> to vector<8x128xi1>
    %47 = arith.select %46, %42, %44 : vector<8x128xi1>, vector<8x128xf32>
    %c8 = arith.constant 8 : index
    %c0_29 = arith.constant 0 : index
    %48 = vector.load %arg11[%c8, %c0_29] : memref<72x128xf32, #tpu.memory_space<vmem>>, vector<8x128xf32>
    tpu.vector_store %arg11[%c8, %c0_29], %47 {strides = array<i32>} : memref<72x128xf32, #tpu.memory_space<vmem>>, vector<8x128xf32>,
    %c0_30 = arith.constant 0 : index
    %c57 = arith.constant 57 : index
    %49 = vector.load %arg10[%c0_30, %c57] : memref<8x384xf32, #tpu.memory_space<vmem>>, vector<8x128xf32>
    %50 = arith.andi %19, %15 : vector<1x128xi1>
    %cst_31 = arith.constant 0.000000e+00 : f32
    %51 = vector.broadcast %cst_31 : f32 to vector<8x128xf32>
    %52 = vector.shape_cast %50 : vector<1x128xi1> to vector<1x128xi1>
    %53 = vector.broadcast %52 : vector<1x128xi1> to vector<8x128xi1>
    %54 = arith.select %53, %49, %51 : vector<8x128xi1>, vector<8x128xf32>
    %c16 = arith.constant 16 : index
    %c0_32 = arith.constant 0 : index
    %55 = vector.load %arg11[%c16, %c0_32] : memref<72x128xf32, #tpu.memory_space<vmem>>, vector<8x128xf32>
    tpu.vector_store %arg11[%c16, %c0_32], %54 {strides = array<i32>} : memref<72x128xf32, #tpu.memory_space<vmem>>, vector<8x128xf32>,
    %c0_33 = arith.constant 0 : index
    %c63 = arith.constant 63 : index
    %56 = vector.load %arg10[%c0_33, %c63] : memref<8x384xf32, #tpu.memory_space<vmem>>, vector<8x128xf32>
    %57 = arith.andi %7, %15 : vector<1x128xi1>
    %cst_34 = arith.constant 0.000000e+00 : f32
    %58 = vector.broadcast %cst_34 : f32 to vector<8x128xf32>
    %59 = vector.shape_cast %57 : vector<1x128xi1> to vector<1x128xi1>
    %60 = vector.broadcast %59 : vector<1x128xi1> to vector<8x128xi1>
    %61 = arith.select %60, %56, %58 : vector<8x128xi1>, vector<8x128xf32>
    %c24 = arith.constant 24 : index
    %c0_35 = arith.constant 0 : index
    %62 = vector.load %arg11[%c24, %c0_35] : memref<72x128xf32, #tpu.memory_space<vmem>>, vector<8x128xf32>
    tpu.vector_store %arg11[%c24, %c0_35], %61 {strides = array<i32>} : memref<72x128xf32, #tpu.memory_space<vmem>>, vector<8x128xf32>,
    %c0_36 = arith.constant 0 : index
    %c64_37 = arith.constant 64 : index
    %63 = vector.load %arg10[%c0_36, %c64_37] : memref<8x384xf32, #tpu.memory_space<vmem>>, vector<8x128xf32>
    %cst_38 = arith.constant 0.000000e+00 : f32
    %64 = vector.broadcast %cst_38 : f32 to vector<8x128xf32>
    %65 = vector.shape_cast %15 : vector<1x128xi1> to vector<1x128xi1>
    %66 = vector.broadcast %65 : vector<1x128xi1> to vector<8x128xi1>
    %67 = arith.select %66, %63, %64 : vector<8x128xi1>, vector<8x128xf32>
    %c32 = arith.constant 32 : index
    %c0_39 = arith.constant 0 : index
    %68 = vector.load %arg11[%c32, %c0_39] : memref<72x128xf32, #tpu.memory_space<vmem>>, vector<8x128xf32>
    tpu.vector_store %arg11[%c32, %c0_39], %67 {strides = array<i32>} : memref<72x128xf32, #tpu.memory_space<vmem>>, vector<8x128xf32>,
    %c0_40 = arith.constant 0 : index
    %c65 = arith.constant 65 : index
    %69 = vector.load %arg10[%c0_40, %c65] : memref<8x384xf32, #tpu.memory_space<vmem>>, vector<8x128xf32>
    %70 = arith.andi %9, %15 : vector<1x128xi1>
    %cst_41 = arith.constant 0.000000e+00 : f32
    %71 = vector.broadcast %cst_41 : f32 to vector<8x128xf32>
    %72 = vector.shape_cast %70 : vector<1x128xi1> to vector<1x128xi1>
    %73 = vector.broadcast %72 : vector<1x128xi1> to vector<8x128xi1>
    %74 = arith.select %73, %69, %71 : vector<8x128xi1>, vector<8x128xf32>
    %c40 = arith.constant 40 : index
    %c0_42 = arith.constant 0 : index
    %75 = vector.load %arg11[%c40, %c0_42] : memref<72x128xf32, #tpu.memory_space<vmem>>, vector<8x128xf32>
    tpu.vector_store %arg11[%c40, %c0_42], %74 {strides = array<i32>} : memref<72x128xf32, #tpu.memory_space<vmem>>, vector<8x128xf32>,
    %c0_43 = arith.constant 0 : index
    %c71 = arith.constant 71 : index
    %76 = vector.load %arg10[%c0_43, %c71] : memref<8x384xf32, #tpu.memory_space<vmem>>, vector<8x128xf32>
    %77 = arith.andi %20, %15 : vector<1x128xi1>
    %cst_44 = arith.constant 0.000000e+00 : f32
    %78 = vector.broadcast %cst_44 : f32 to vector<8x128xf32>
    %79 = vector.shape_cast %77 : vector<1x128xi1> to vector<1x128xi1>
    %80 = vector.broadcast %79 : vector<1x128xi1> to vector<8x128xi1>
    %81 = arith.select %80, %76, %78 : vector<8x128xi1>, vector<8x128xf32>
    %c48 = arith.constant 48 : index
    %c0_45 = arith.constant 0 : index
    %82 = vector.load %arg11[%c48, %c0_45] : memref<72x128xf32, #tpu.memory_space<vmem>>, vector<8x128xf32>
    tpu.vector_store %arg11[%c48, %c0_45], %81 {strides = array<i32>} : memref<72x128xf32, #tpu.memory_space<vmem>>, vector<8x128xf32>,
    %c0_46 = arith.constant 0 : index
    %c72 = arith.constant 72 : index
    %83 = vector.load %arg10[%c0_46, %c72] : memref<8x384xf32, #tpu.memory_space<vmem>>, vector<8x128xf32>
    %84 = arith.andi %13, %15 : vector<1x128xi1>
    %cst_47 = arith.constant 0.000000e+00 : f32
    %85 = vector.broadcast %cst_47 : f32 to vector<8x128xf32>
    %86 = vector.shape_cast %84 : vector<1x128xi1> to vector<1x128xi1>
    %87 = vector.broadcast %86 : vector<1x128xi1> to vector<8x128xi1>
    %88 = arith.select %87, %83, %85 : vector<8x128xi1>, vector<8x128xf32>
    %c56_48 = arith.constant 56 : index
    %c0_49 = arith.constant 0 : index
    %89 = vector.load %arg11[%c56_48, %c0_49] : memref<72x128xf32, #tpu.memory_space<vmem>>, vector<8x128xf32>
    tpu.vector_store %arg11[%c56_48, %c0_49], %88 {strides = array<i32>} : memref<72x128xf32, #tpu.memory_space<vmem>>, vector<8x128xf32>,
    %c0_50 = arith.constant 0 : index
    %c73 = arith.constant 73 : index
    %90 = vector.load %arg10[%c0_50, %c73] : memref<8x384xf32, #tpu.memory_space<vmem>>, vector<8x128xf32>
    %91 = arith.andi %21, %15 : vector<1x128xi1>
    %cst_51 = arith.constant 0.000000e+00 : f32
    %92 = vector.broadcast %cst_51 : f32 to vector<8x128xf32>
    %93 = vector.shape_cast %91 : vector<1x128xi1> to vector<1x128xi1>
    %94 = vector.broadcast %93 : vector<1x128xi1> to vector<8x128xi1>
    %95 = arith.select %94, %90, %92 : vector<8x128xi1>, vector<8x128xf32>
    %c64_52 = arith.constant 64 : index
    %c0_53 = arith.constant 0 : index
    %96 = vector.load %arg11[%c64_52, %c0_53] : memref<72x128xf32, #tpu.memory_space<vmem>>, vector<8x128xf32>
    tpu.vector_store %arg11[%c64_52, %c0_53], %95 {strides = array<i32>} : memref<72x128xf32, #tpu.memory_space<vmem>>, vector<8x128xf32>,
    %c0_54 = arith.constant 0 : index
    %c0_55 = arith.constant 0 : index
    %c0_56 = arith.constant 0 : index
    %97 = vector.load %arg6[%c0_54, %c0_55, %c0_56] : memref<3x16x72xf32, #tpu.memory_space<vmem>>, vector<1x16x72xf32>
    %98 = vector.shape_cast %97 : vector<1x16x72xf32> to vector<16x72xf32>
    %c0_57 = arith.constant 0 : index
    %c0_58 = arith.constant 0 : index
    %99 = vector.load %arg11[%c0_57, %c0_58] : memref<72x128xf32, #tpu.memory_space<vmem>>, vector<72x128xf32>
    %cst_59 = arith.constant dense<0.000000e+00> : vector<16x128xf32>
    %100 = tpu.matmul %98, %99, %cst_59 {dimension_numbers = #tpu.dot_dimension_numbers<[1], [0], [0], [1], [0, 0, 1, 1], [], []>} : vector<16x72xf32>, vector<72x128xf32>, vector<16x128xf32> -> vector<16x128xf32>
    %c0_60 = arith.constant 0 : index
    %c119 = arith.constant 119 : index
    %101 = vector.load %arg10[%c0_60, %c119] : memref<8x384xf32, #tpu.memory_space<vmem>>, vector<8x128xf32>
    %cst_61 = arith.constant 0.000000e+00 : f32
    %102 = vector.broadcast %cst_61 : f32 to vector<8x128xf32>
    %103 = vector.shape_cast %18 : vector<1x128xi1> to vector<1x128xi1>
    %104 = vector.broadcast %103 : vector<1x128xi1> to vector<8x128xi1>
    %105 = arith.select %104, %101, %102 : vector<8x128xi1>, vector<8x128xf32>
    %c0_62 = arith.constant 0 : index
    %c0_63 = arith.constant 0 : index
    %106 = vector.load %arg11[%c0_62, %c0_63] : memref<72x128xf32, #tpu.memory_space<vmem>>, vector<8x128xf32>
    tpu.vector_store %arg11[%c0_62, %c0_63], %105 {strides = array<i32>} : memref<72x128xf32, #tpu.memory_space<vmem>>, vector<8x128xf32>,
    %c0_64 = arith.constant 0 : index
    %c120 = arith.constant 120 : index
    %107 = vector.load %arg10[%c0_64, %c120] : memref<8x384xf32, #tpu.memory_space<vmem>>, vector<8x128xf32>
    %cst_65 = arith.constant 0.000000e+00 : f32
    %108 = vector.broadcast %cst_65 : f32 to vector<8x128xf32>
    %109 = vector.shape_cast %11 : vector<1x128xi1> to vector<1x128xi1>
    %110 = vector.broadcast %109 : vector<1x128xi1> to vector<8x128xi1>
    %111 = arith.select %110, %107, %108 : vector<8x128xi1>, vector<8x128xf32>
    %c8_66 = arith.constant 8 : index
    %c0_67 = arith.constant 0 : index
    %112 = vector.load %arg11[%c8_66, %c0_67] : memref<72x128xf32, #tpu.memory_space<vmem>>, vector<8x128xf32>
    tpu.vector_store %arg11[%c8_66, %c0_67], %111 {strides = array<i32>} : memref<72x128xf32, #tpu.memory_space<vmem>>, vector<8x128xf32>,
    %c0_68 = arith.constant 0 : index
    %c121 = arith.constant 121 : index
    %113 = vector.load %arg10[%c0_68, %c121] : memref<8x384xf32, #tpu.memory_space<vmem>>, vector<8x128xf32>
    %cst_69 = arith.constant 0.000000e+00 : f32
    %114 = vector.broadcast %cst_69 : f32 to vector<8x128xf32>
    %115 = vector.shape_cast %19 : vector<1x128xi1> to vector<1x128xi1>
    %116 = vector.broadcast %115 : vector<1x128xi1> to vector<8x128xi1>
    %117 = arith.select %116, %113, %114 : vector<8x128xi1>, vector<8x128xf32>
    %c16_70 = arith.constant 16 : index
    %c0_71 = arith.constant 0 : index
    %118 = vector.load %arg11[%c16_70, %c0_71] : memref<72x128xf32, #tpu.memory_space<vmem>>, vector<8x128xf32>
    tpu.vector_store %arg11[%c16_70, %c0_71], %117 {strides = array<i32>} : memref<72x128xf32, #tpu.memory_space<vmem>>, vector<8x128xf32>,
    %c0_72 = arith.constant 0 : index
    %c127 = arith.constant 127 : index
    %119 = vector.load %arg10[%c0_72, %c127] : memref<8x384xf32, #tpu.memory_space<vmem>>, vector<8x128xf32>
    %cst_73 = arith.constant 0.000000e+00 : f32
    %120 = vector.broadcast %cst_73 : f32 to vector<8x128xf32>
    %121 = vector.shape_cast %7 : vector<1x128xi1> to vector<1x128xi1>
    %122 = vector.broadcast %121 : vector<1x128xi1> to vector<8x128xi1>
    %123 = arith.select %122, %119, %120 : vector<8x128xi1>, vector<8x128xf32>
    %c24_74 = arith.constant 24 : index
    %c0_75 = arith.constant 0 : index
    %124 = vector.load %arg11[%c24_74, %c0_75] : memref<72x128xf32, #tpu.memory_space<vmem>>, vector<8x128xf32>
    tpu.vector_store %arg11[%c24_74, %c0_75], %123 {strides = array<i32>} : memref<72x128xf32, #tpu.memory_space<vmem>>, vector<8x128xf32>,
    %c0_76 = arith.constant 0 : index
    %c128_77 = arith.constant 128 : index
    %125 = vector.load %arg10[%c0_76, %c128_77] : memref<8x384xf32, #tpu.memory_space<vmem>>, vector<8x128xf32>
    %c32_78 = arith.constant 32 : index
    %c0_79 = arith.constant 0 : index
    %126 = vector.load %arg11[%c32_78, %c0_79] : memref<72x128xf32, #tpu.memory_space<vmem>>, vector<8x128xf32>
    tpu.vector_store %arg11[%c32_78, %c0_79], %125 {strides = array<i32>} : memref<72x128xf32, #tpu.memory_space<vmem>>, vector<8x128xf32>,
    %c0_80 = arith.constant 0 : index
    %c129 = arith.constant 129 : index
    %127 = vector.load %arg10[%c0_80, %c129] : memref<8x384xf32, #tpu.memory_space<vmem>>, vector<8x128xf32>
    %cst_81 = arith.constant 0.000000e+00 : f32
    %128 = vector.broadcast %cst_81 : f32 to vector<8x128xf32>
    %129 = vector.shape_cast %9 : vector<1x128xi1> to vector<1x128xi1>
    %130 = vector.broadcast %129 : vector<1x128xi1> to vector<8x128xi1>
    %131 = arith.select %130, %127, %128 : vector<8x128xi1>, vector<8x128xf32>
    %c40_82 = arith.constant 40 : index
    %c0_83 = arith.constant 0 : index
    %132 = vector.load %arg11[%c40_82, %c0_83] : memref<72x128xf32, #tpu.memory_space<vmem>>, vector<8x128xf32>
    tpu.vector_store %arg11[%c40_82, %c0_83], %131 {strides = array<i32>} : memref<72x128xf32, #tpu.memory_space<vmem>>, vector<8x128xf32>,
    %c0_84 = arith.constant 0 : index
    %c135 = arith.constant 135 : index
    %133 = vector.load %arg10[%c0_84, %c135] : memref<8x384xf32, #tpu.memory_space<vmem>>, vector<8x128xf32>
    %cst_85 = arith.constant 0.000000e+00 : f32
    %134 = vector.broadcast %cst_85 : f32 to vector<8x128xf32>
    %135 = vector.shape_cast %20 : vector<1x128xi1> to vector<1x128xi1>
    %136 = vector.broadcast %135 : vector<1x128xi1> to vector<8x128xi1>
    %137 = arith.select %136, %133, %134 : vector<8x128xi1>, vector<8x128xf32>
    %c48_86 = arith.constant 48 : index
    %c0_87 = arith.constant 0 : index
    %138 = vector.load %arg11[%c48_86, %c0_87] : memref<72x128xf32, #tpu.memory_space<vmem>>, vector<8x128xf32>
    tpu.vector_store %arg11[%c48_86, %c0_87], %137 {strides = array<i32>} : memref<72x128xf32, #tpu.memory_space<vmem>>, vector<8x128xf32>,
    %c0_88 = arith.constant 0 : index
    %c136 = arith.constant 136 : index
    %139 = vector.load %arg10[%c0_88, %c136] : memref<8x384xf32, #tpu.memory_space<vmem>>, vector<8x128xf32>
    %cst_89 = arith.constant 0.000000e+00 : f32
    %140 = vector.broadcast %cst_89 : f32 to vector<8x128xf32>
    %141 = vector.shape_cast %13 : vector<1x128xi1> to vector<1x128xi1>
    %142 = vector.broadcast %141 : vector<1x128xi1> to vector<8x128xi1>
    %143 = arith.select %142, %139, %140 : vector<8x128xi1>, vector<8x128xf32>
    %c56_90 = arith.constant 56 : index
    %c0_91 = arith.constant 0 : index
    %144 = vector.load %arg11[%c56_90, %c0_91] : memref<72x128xf32, #tpu.memory_space<vmem>>, vector<8x128xf32>
    tpu.vector_store %arg11[%c56_90, %c0_91], %143 {strides = array<i32>} : memref<72x128xf32, #tpu.memory_space<vmem>>, vector<8x128xf32>,
    %c0_92 = arith.constant 0 : index
    %c137 = arith.constant 137 : index
    %145 = vector.load %arg10[%c0_92, %c137] : memref<8x384xf32, #tpu.memory_space<vmem>>, vector<8x128xf32>
    %cst_93 = arith.constant 0.000000e+00 : f32
    %146 = vector.broadcast %cst_93 : f32 to vector<8x128xf32>
    %147 = vector.shape_cast %21 : vector<1x128xi1> to vector<1x128xi1>
    %148 = vector.broadcast %147 : vector<1x128xi1> to vector<8x128xi1>
    %149 = arith.select %148, %145, %146 : vector<8x128xi1>, vector<8x128xf32>
    %c64_94 = arith.constant 64 : index
    %c0_95 = arith.constant 0 : index
    %150 = vector.load %arg11[%c64_94, %c0_95] : memref<72x128xf32, #tpu.memory_space<vmem>>, vector<8x128xf32>
    tpu.vector_store %arg11[%c64_94, %c0_95], %149 {strides = array<i32>} : memref<72x128xf32, #tpu.memory_space<vmem>>, vector<8x128xf32>,
    %c1_96 = arith.constant 1 : index
    %c0_97 = arith.constant 0 : index
    %c0_98 = arith.constant 0 : index
    %151 = vector.load %arg6[%c1_96, %c0_97, %c0_98] : memref<3x16x72xf32, #tpu.memory_space<vmem>>, vector<1x16x72xf32>
    %152 = vector.shape_cast %151 : vector<1x16x72xf32> to vector<16x72xf32>
    %c0_99 = arith.constant 0 : index
    %c0_100 = arith.constant 0 : index
    %153 = vector.load %arg11[%c0_99, %c0_100] : memref<72x128xf32, #tpu.memory_space<vmem>>, vector<72x128xf32>
    %cst_101 = arith.constant dense<0.000000e+00> : vector<16x128xf32>
    %154 = tpu.matmul %152, %153, %cst_101 {dimension_numbers = #tpu.dot_dimension_numbers<[1], [0], [0], [1], [0, 0, 1, 1], [], []>} : vector<16x72xf32>, vector<72x128xf32>, vector<16x128xf32> -> vector<16x128xf32>
    %155 = arith.addf %100, %154 : vector<16x128xf32>
    %c0_102 = arith.constant 0 : index
    %c183 = arith.constant 183 : index
    %156 = vector.load %arg10[%c0_102, %c183] : memref<8x384xf32, #tpu.memory_space<vmem>>, vector<8x128xf32>
    %157 = arith.andi %18, %17 : vector<1x128xi1>
    %cst_103 = arith.constant 0.000000e+00 : f32
    %158 = vector.broadcast %cst_103 : f32 to vector<8x128xf32>
    %159 = vector.shape_cast %157 : vector<1x128xi1> to vector<1x128xi1>
    %160 = vector.broadcast %159 : vector<1x128xi1> to vector<8x128xi1>
    %161 = arith.select %160, %156, %158 : vector<8x128xi1>, vector<8x128xf32>
    %c0_104 = arith.constant 0 : index
    %c0_105 = arith.constant 0 : index
    %162 = vector.load %arg11[%c0_104, %c0_105] : memref<72x128xf32, #tpu.memory_space<vmem>>, vector<8x128xf32>
    tpu.vector_store %arg11[%c0_104, %c0_105], %161 {strides = array<i32>} : memref<72x128xf32, #tpu.memory_space<vmem>>, vector<8x128xf32>,
    %c0_106 = arith.constant 0 : index
    %c184 = arith.constant 184 : index
    %163 = vector.load %arg10[%c0_106, %c184] : memref<8x384xf32, #tpu.memory_space<vmem>>, vector<8x128xf32>
    %164 = arith.andi %11, %17 : vector<1x128xi1>
    %cst_107 = arith.constant 0.000000e+00 : f32
    %165 = vector.broadcast %cst_107 : f32 to vector<8x128xf32>
    %166 = vector.shape_cast %164 : vector<1x128xi1> to vector<1x128xi1>
    %167 = vector.broadcast %166 : vector<1x128xi1> to vector<8x128xi1>
    %168 = arith.select %167, %163, %165 : vector<8x128xi1>, vector<8x128xf32>
    %c8_108 = arith.constant 8 : index
    %c0_109 = arith.constant 0 : index
    %169 = vector.load %arg11[%c8_108, %c0_109] : memref<72x128xf32, #tpu.memory_space<vmem>>, vector<8x128xf32>
    tpu.vector_store %arg11[%c8_108, %c0_109], %168 {strides = array<i32>} : memref<72x128xf32, #tpu.memory_space<vmem>>, vector<8x128xf32>,
    %c0_110 = arith.constant 0 : index
    %c185 = arith.constant 185 : index
    %170 = vector.load %arg10[%c0_110, %c185] : memref<8x384xf32, #tpu.memory_space<vmem>>, vector<8x128xf32>
    %171 = arith.andi %19, %17 : vector<1x128xi1>
    %cst_111 = arith.constant 0.000000e+00 : f32
    %172 = vector.broadcast %cst_111 : f32 to vector<8x128xf32>
    %173 = vector.shape_cast %171 : vector<1x128xi1> to vector<1x128xi1>
    %174 = vector.broadcast %173 : vector<1x128xi1> to vector<8x128xi1>
    %175 = arith.select %174, %170, %172 : vector<8x128xi1>, vector<8x128xf32>
    %c16_112 = arith.constant 16 : index
    %c0_113 = arith.constant 0 : index
    %176 = vector.load %arg11[%c16_112, %c0_113] : memref<72x128xf32, #tpu.memory_space<vmem>>, vector<8x128xf32>
    tpu.vector_store %arg11[%c16_112, %c0_113], %175 {strides = array<i32>} : memref<72x128xf32, #tpu.memory_space<vmem>>, vector<8x128xf32>,
    %c0_114 = arith.constant 0 : index
    %c191 = arith.constant 191 : index
    %177 = vector.load %arg10[%c0_114, %c191] : memref<8x384xf32, #tpu.memory_space<vmem>>, vector<8x128xf32>
    %178 = arith.andi %7, %17 : vector<1x128xi1>
    %cst_115 = arith.constant 0.000000e+00 : f32
    %179 = vector.broadcast %cst_115 : f32 to vector<8x128xf32>
    %180 = vector.shape_cast %178 : vector<1x128xi1> to vector<1x128xi1>
    %181 = vector.broadcast %180 : vector<1x128xi1> to vector<8x128xi1>
    %182 = arith.select %181, %177, %179 : vector<8x128xi1>, vector<8x128xf32>
    %c24_116 = arith.constant 24 : index
    %c0_117 = arith.constant 0 : index
    %183 = vector.load %arg11[%c24_116, %c0_117] : memref<72x128xf32, #tpu.memory_space<vmem>>, vector<8x128xf32>
    tpu.vector_store %arg11[%c24_116, %c0_117], %182 {strides = array<i32>} : memref<72x128xf32, #tpu.memory_space<vmem>>, vector<8x128xf32>,
    %c0_118 = arith.constant 0 : index
    %c192 = arith.constant 192 : index
    %184 = vector.load %arg10[%c0_118, %c192] : memref<8x384xf32, #tpu.memory_space<vmem>>, vector<8x128xf32>
    %cst_119 = arith.constant 0.000000e+00 : f32
    %185 = vector.broadcast %cst_119 : f32 to vector<8x128xf32>
    %186 = vector.shape_cast %17 : vector<1x128xi1> to vector<1x128xi1>
    %187 = vector.broadcast %186 : vector<1x128xi1> to vector<8x128xi1>
    %188 = arith.select %187, %184, %185 : vector<8x128xi1>, vector<8x128xf32>
    %c32_120 = arith.constant 32 : index
    %c0_121 = arith.constant 0 : index
    %189 = vector.load %arg11[%c32_120, %c0_121] : memref<72x128xf32, #tpu.memory_space<vmem>>, vector<8x128xf32>
    tpu.vector_store %arg11[%c32_120, %c0_121], %188 {strides = array<i32>} : memref<72x128xf32, #tpu.memory_space<vmem>>, vector<8x128xf32>,
    %c0_122 = arith.constant 0 : index
    %c193 = arith.constant 193 : index
    %190 = vector.load %arg10[%c0_122, %c193] : memref<8x384xf32, #tpu.memory_space<vmem>>, vector<8x128xf32>
    %191 = arith.andi %9, %17 : vector<1x128xi1>
    %cst_123 = arith.constant 0.000000e+00 : f32
    %192 = vector.broadcast %cst_123 : f32 to vector<8x128xf32>
    %193 = vector.shape_cast %191 : vector<1x128xi1> to vector<1x128xi1>
    %194 = vector.broadcast %193 : vector<1x128xi1> to vector<8x128xi1>
    %195 = arith.select %194, %190, %192 : vector<8x128xi1>, vector<8x128xf32>
    %c40_124 = arith.constant 40 : index
    %c0_125 = arith.constant 0 : index
    %196 = vector.load %arg11[%c40_124, %c0_125] : memref<72x128xf32, #tpu.memory_space<vmem>>, vector<8x128xf32>
    tpu.vector_store %arg11[%c40_124, %c0_125], %195 {strides = array<i32>} : memref<72x128xf32, #tpu.memory_space<vmem>>, vector<8x128xf32>,
    %c0_126 = arith.constant 0 : index
    %c199 = arith.constant 199 : index
    %197 = vector.load %arg10[%c0_126, %c199] : memref<8x384xf32, #tpu.memory_space<vmem>>, vector<8x128xf32>
    %198 = arith.andi %20, %17 : vector<1x128xi1>
    %cst_127 = arith.constant 0.000000e+00 : f32
    %199 = vector.broadcast %cst_127 : f32 to vector<8x128xf32>
    %200 = vector.shape_cast %198 : vector<1x128xi1> to vector<1x128xi1>
    %201 = vector.broadcast %200 : vector<1x128xi1> to vector<8x128xi1>
    %202 = arith.select %201, %197, %199 : vector<8x128xi1>, vector<8x128xf32>
    %c48_128 = arith.constant 48 : index
    %c0_129 = arith.constant 0 : index
    %203 = vector.load %arg11[%c48_128, %c0_129] : memref<72x128xf32, #tpu.memory_space<vmem>>, vector<8x128xf32>
    tpu.vector_store %arg11[%c48_128, %c0_129], %202 {strides = array<i32>} : memref<72x128xf32, #tpu.memory_space<vmem>>, vector<8x128xf32>,
    %c0_130 = arith.constant 0 : index
    %c200 = arith.constant 200 : index
    %204 = vector.load %arg10[%c0_130, %c200] : memref<8x384xf32, #tpu.memory_space<vmem>>, vector<8x128xf32>
    %205 = arith.andi %13, %17 : vector<1x128xi1>
    %cst_131 = arith.constant 0.000000e+00 : f32
    %206 = vector.broadcast %cst_131 : f32 to vector<8x128xf32>
    %207 = vector.shape_cast %205 : vector<1x128xi1> to vector<1x128xi1>
    %208 = vector.broadcast %207 : vector<1x128xi1> to vector<8x128xi1>
    %209 = arith.select %208, %204, %206 : vector<8x128xi1>, vector<8x128xf32>
    %c56_132 = arith.constant 56 : index
    %c0_133 = arith.constant 0 : index
    %210 = vector.load %arg11[%c56_132, %c0_133] : memref<72x128xf32, #tpu.memory_space<vmem>>, vector<8x128xf32>
    tpu.vector_store %arg11[%c56_132, %c0_133], %209 {strides = array<i32>} : memref<72x128xf32, #tpu.memory_space<vmem>>, vector<8x128xf32>,
    %c0_134 = arith.constant 0 : index
    %c201 = arith.constant 201 : index
    %211 = vector.load %arg10[%c0_134, %c201] : memref<8x384xf32, #tpu.memory_space<vmem>>, vector<8x128xf32>
    %212 = arith.andi %21, %17 : vector<1x128xi1>
    %cst_135 = arith.constant 0.000000e+00 : f32
    %213 = vector.broadcast %cst_135 : f32 to vector<8x128xf32>
    %214 = vector.shape_cast %212 : vector<1x128xi1> to vector<1x128xi1>
    %215 = vector.broadcast %214 : vector<1x128xi1> to vector<8x128xi1>
    %216 = arith.select %215, %211, %213 : vector<8x128xi1>, vector<8x128xf32>
    %c64_136 = arith.constant 64 : index
    %c0_137 = arith.constant 0 : index
    %217 = vector.load %arg11[%c64_136, %c0_137] : memref<72x128xf32, #tpu.memory_space<vmem>>, vector<8x128xf32>
    tpu.vector_store %arg11[%c64_136, %c0_137], %216 {strides = array<i32>} : memref<72x128xf32, #tpu.memory_space<vmem>>, vector<8x128xf32>,
    %c2_138 = arith.constant 2 : index
    %c0_139 = arith.constant 0 : index
    %c0_140 = arith.constant 0 : index
    %218 = vector.load %arg6[%c2_138, %c0_139, %c0_140] : memref<3x16x72xf32, #tpu.memory_space<vmem>>, vector<1x16x72xf32>
    %219 = vector.shape_cast %218 : vector<1x16x72xf32> to vector<16x72xf32>
    %c0_141 = arith.constant 0 : index
    %c0_142 = arith.constant 0 : index
    %220 = vector.load %arg11[%c0_141, %c0_142] : memref<72x128xf32, #tpu.memory_space<vmem>>, vector<72x128xf32>
    %cst_143 = arith.constant dense<0.000000e+00> : vector<16x128xf32>
    %221 = tpu.matmul %219, %220, %cst_143 {dimension_numbers = #tpu.dot_dimension_numbers<[1], [0], [0], [1], [0, 0, 1, 1], [], []>} : vector<16x72xf32>, vector<72x128xf32>, vector<16x128xf32> -> vector<16x128xf32>
    %222 = arith.addf %155, %221 : vector<16x128xf32>
    %c0_144 = arith.constant 0 : index
    %c0_145 = arith.constant 0 : index
    %c0_146 = arith.constant 0 : index
    %223 = vector.load %arg7[%c0_144, %c0_145, %c0_146] : memref<1x16x128xf32, #tpu.memory_space<vmem>>, vector<1x16x128xf32>
    %224 = vector.shape_cast %223 : vector<1x16x128xf32> to vector<16x128xf32>
    %225 = vector.shape_cast %222 : vector<16x128xf32> to vector<1x16x128xf32>
    tpu.vector_store %arg7[%c0_144, %c0_145, %c0_146], %225 {strides = array<i32>} : memref<1x16x128xf32, #tpu.memory_space<vmem>>, vector<1x16x128xf32>,
    %cst_147 = arith.constant dense<0.000000e+00> : vector<16xf32>
    %226 = vector.multi_reduction <add>, %222, %cst_147 [1] : vector<16x128xf32> to vector<16xf32>
    %227 = vector.shape_cast %226 : vector<16xf32> to vector<1x16xf32>
    %c0_148 = arith.constant 0 : index
    %c0_149 = arith.constant 0 : index
    %c0_150 = arith.constant 0 : index
    %c0_151 = arith.constant 0 : index
    %228 = vector.load %arg8[%c0_148, %c0_149, %c0_150, %c0_151] : memref<1x1x1x16xf32, #tpu.memory_space<vmem>>, vector<1x1x1x16xf32>
    %229 = vector.shape_cast %228 : vector<1x1x1x16xf32> to vector<1x16xf32>
    %230 = vector.shape_cast %227 : vector<1x16xf32> to vector<1x1x1x16xf32>
    tpu.vector_store %arg8[%c0_148, %c0_149, %c0_150, %c0_151], %230 {strides = array<i32>} : memref<1x1x1x16xf32, #tpu.memory_space<vmem>>, vector<1x1x1x16xf32>,
    %231 = arith.mulf %222, %222 : vector<16x128xf32>
    %cst_152 = arith.constant dense<0.000000e+00> : vector<16xf32>
    %232 = vector.multi_reduction <add>, %231, %cst_152 [1] : vector<16x128xf32> to vector<16xf32>
    %233 = vector.shape_cast %232 : vector<16xf32> to vector<1x16xf32>
    %c0_153 = arith.constant 0 : index
    %c0_154 = arith.constant 0 : index
    %c0_155 = arith.constant 0 : index
    %c0_156 = arith.constant 0 : index
    %234 = vector.load %arg9[%c0_153, %c0_154, %c0_155, %c0_156] : memref<1x1x1x16xf32, #tpu.memory_space<vmem>>, vector<1x1x1x16xf32>
    %235 = vector.shape_cast %234 : vector<1x1x1x16xf32> to vector<1x16xf32>
    %236 = vector.shape_cast %233 : vector<1x16xf32> to vector<1x1x1x16xf32>
    tpu.vector_store %arg9[%c0_153, %c0_154, %c0_155, %c0_156], %236 {strides = array<i32>} : memref<1x1x1x16xf32, #tpu.memory_space<vmem>>, vector<1x1x1x16xf32>,
    return
  }
  func.func @transform_0(%arg0: i32, %arg1: i32) -> (i32, i32) {
    %c0_i32 = arith.constant 0 : i32
    %c0_i32_0 = arith.constant 0 : i32
    %c0_i32_1 = arith.constant 0 : i32
    return %c0_i32, %c0_i32_0 : i32, i32
  }
  func.func @transform_1(%arg0: i32, %arg1: i32) -> (i32, i32, i32) {
    %c1_i32 = arith.constant 1 : i32
    %0 = arith.muli %arg1, %c1_i32 : i32
    %c1_i32_0 = arith.constant 1 : i32
    %1 = arith.subi %0, %c1_i32_0 : i32
    %c0_i32 = arith.constant 0 : i32
    %2 = arith.maxsi %1, %c0_i32 : i32
    %c0_i32_1 = arith.constant 0 : i32
    %c0_i32_2 = arith.constant 0 : i32
    return %arg0, %c0_i32_1, %2 : i32, i32, i32
  }
  func.func @transform_2(%arg0: i32, %arg1: i32) -> (i32, i32, i32) {
    %c0_i32 = arith.constant 0 : i32
    %c0_i32_0 = arith.constant 0 : i32
    return %arg0, %c0_i32, %arg1 : i32, i32, i32
  }
  func.func @transform_3(%arg0: i32, %arg1: i32) -> (i32, i32, i32) {
    %c1_i32 = arith.constant 1 : i32
    %0 = arith.addi %arg1, %c1_i32 : i32
    %c1_i32_0 = arith.constant 1 : i32
    %1 = arith.muli %0, %c1_i32_0 : i32
    %c3_i32 = arith.constant 3 : i32
    %2 = arith.minsi %1, %c3_i32 : i32
    %c0_i32 = arith.constant 0 : i32
    %c0_i32_1 = arith.constant 0 : i32
    return %arg0, %c0_i32, %2 : i32, i32, i32
  }
  func.func @transform_4(%arg0: i32, %arg1: i32) -> (i32, i32, i32) {
    %c0_i32 = arith.constant 0 : i32
    %c0_i32_0 = arith.constant 0 : i32
    %c0_i32_1 = arith.constant 0 : i32
    %c0_i32_2 = arith.constant 0 : i32
    return %c0_i32, %c0_i32_0, %c0_i32_1 : i32, i32, i32
  }
  func.func @transform_5(%arg0: i32, %arg1: i32) -> (i32, i32, i32) {
    %c0_i32 = arith.constant 0 : i32
    %c0_i32_0 = arith.constant 0 : i32
    return %arg0, %c0_i32, %arg1 : i32, i32, i32
  }
  func.func @transform_6(%arg0: i32, %arg1: i32) -> (i32, i32, i32, i32) {
    %c0_i32 = arith.constant 0 : i32
    %c0_i32_0 = arith.constant 0 : i32
    %c0_i32_1 = arith.constant 0 : i32
    return %arg0, %arg1, %c0_i32, %c0_i32_0 : i32, i32, i32, i32
  }
  func.func @transform_7(%arg0: i32, %arg1: i32) -> (i32, i32, i32, i32) {
    %c0_i32 = arith.constant 0 : i32
    %c0_i32_0 = arith.constant 0 : i32
    %c0_i32_1 = arith.constant 0 : i32
    return %arg0, %arg1, %c0_i32, %c0_i32_0 : i32, i32, i32, i32
  }
}

module attributes {stable_mosaic.version = 11 : i64} {
  func.func @_bn_relu_kernel(%arg0: i32, %arg1: i32, %arg2: memref<32x512xf32, #tpu.memory_space<vmem>>, %arg3: memref<32x1xf32, #tpu.memory_space<vmem>>, %arg4: memref<32x1xf32, #tpu.memory_space<vmem>>, %arg5: memref<32x512xf32, #tpu.memory_space<vmem>>) attributes {dimension_semantics = [#tpu.dimension_semantics<parallel>, #tpu.dimension_semantics<parallel>], iteration_bounds = array<i64: 1, 1>, scalar_prefetch = 0 : i64, scratch_operands = 0 : i64, tpu.core_type = #tpu.core_type<tc>, window_params = [{transform_indices = @transform_0, window_bounds = array<i64: 32, 512>}, {transform_indices = @transform_1, window_bounds = array<i64: 32, 1>}, {transform_indices = @transform_2, window_bounds = array<i64: 32, 1>}, {transform_indices = @transform_3, window_bounds = array<i64: 32, 512>}]} {
    %c0 = arith.constant 0 : index
    %c0_0 = arith.constant 0 : index
    %0 = vector.load %arg2[%c0, %c0_0] : memref<32x512xf32, #tpu.memory_space<vmem>>, vector<32x512xf32>
    %c0_1 = arith.constant 0 : index
    %c0_2 = arith.constant 0 : index
    %1 = vector.load %arg3[%c0_1, %c0_2] : memref<32x1xf32, #tpu.memory_space<vmem>>, vector<32x1xf32>
    %2 = vector.broadcast %1 : vector<32x1xf32> to vector<32x512xf32>
    %3 = arith.mulf %0, %2 : vector<32x512xf32>
    %c0_3 = arith.constant 0 : index
    %c0_4 = arith.constant 0 : index
    %4 = vector.load %arg4[%c0_3, %c0_4] : memref<32x1xf32, #tpu.memory_space<vmem>>, vector<32x1xf32>
    %5 = vector.broadcast %4 : vector<32x1xf32> to vector<32x512xf32>
    %6 = arith.addf %3, %5 : vector<32x512xf32>
    %cst = arith.constant 0.000000e+00 : f32
    %7 = vector.broadcast %cst : f32 to vector<32x512xf32>
    %8 = arith.maximumf %6, %7 : vector<32x512xf32>
    %c0_5 = arith.constant 0 : index
    %c0_6 = arith.constant 0 : index
    %9 = vector.load %arg5[%c0_5, %c0_6] : memref<32x512xf32, #tpu.memory_space<vmem>>, vector<32x512xf32>
    tpu.vector_store %arg5[%c0_5, %c0_6], %8 {strides = array<i32>} : memref<32x512xf32, #tpu.memory_space<vmem>>, vector<32x512xf32>,
    return
  }
  func.func @transform_0(%arg0: i32, %arg1: i32) -> (i32, i32) {
    %c0_i32 = arith.constant 0 : i32
    return %arg0, %arg1 : i32, i32
  }
  func.func @transform_1(%arg0: i32, %arg1: i32) -> (i32, i32) {
    %c0_i32 = arith.constant 0 : i32
    %c0_i32_0 = arith.constant 0 : i32
    return %arg0, %c0_i32 : i32, i32
  }
  func.func @transform_2(%arg0: i32, %arg1: i32) -> (i32, i32) {
    %c0_i32 = arith.constant 0 : i32
    %c0_i32_0 = arith.constant 0 : i32
    return %arg0, %c0_i32 : i32, i32
  }
  func.func @transform_3(%arg0: i32, %arg1: i32) -> (i32, i32) {
    %c0_i32 = arith.constant 0 : i32
    return %arg0, %arg1 : i32, i32
  }
}

</mosaic_0001>

<llo_original>
// kernel: tile.18
$region0: #{tile.18}
  #allocation0 [shape = 's32[1]{0}', space=sflag, size = 0x4, scoped, tag = 'scoped memory for tile.18']
  %s0 = inlined_call_operand.vmem [shape: f32[16], index: 0, kind: input, shape index: {}]
  %s1 = inlined_call_operand.vmem [shape: f32[2,16], index: 1, kind: output, shape index: {}]
  // Predicated region
  $region2: #{tile.18} parent=0 // pred_check
    _
  $region3: #{tile.18} parent=0 // pred_check_branch
    %3 = sbr.rel (0) target = $region5
  $region4: #{tile.18} parent=0 // pred_region
    _
  $region5: #{tile.18} parent=0 // pred_fallthru
    _
  %v4 = vld [vmem:[%s0] ss:$0 sm:$0xff]
  %5 = vst [vmem:[%s1] sm:$0x3] %v4

// kernel: tile.0
$region0: #{tile.0}
  %s0 = inlined_call_operand.vmem [shape: f32[2,16], index: 0, kind: input, shape index: {}]
  %s1 = inlined_call_operand.vmem [shape: f32[32,1], index: 1, kind: output, shape index: {}]
  $region1: #{tile.0} parent=0
    #allocation0 [shape = 'u8[4096]{0}', space=vmem, size = 0x1000, scoped, tag = 'scoped mem for input reshape']
    %s3 = ssub.s32 4, 1
    %v4 = vld [vmem:[%s0] sm:%s3]
    %5 = vst [vmem:[#allocation0] sm:%s3] %v4
    %v6 = vld [vmem:[#allocation0] sm:$0x3]
    %vm7 = vcmask 7168
    %8 = vst.msk [vmem:[%s1] ss:$16 sm:$0x3] %vm7, %v6
    %v9 = vld [vmem:[#allocation0] sm:$0x3]
    %10 = vrot.lane.b32.xlu0 %v9, 127
    %v11 = vpop.permute.xlu0 %10
    %vm12 = vcmask 7168
    %s13 = scalar_lea.vmem %s1, 1
    %14 = vst.msk [vmem:[%s13] ss:$16 sm:$0x3] %vm12, %v11
    %v15 = vld [vmem:[#allocation0] sm:$0x3]
    %16 = vrot.lane.b32.xlu0 %v15, 126
    %v17 = vpop.permute.xlu0 %16
    %vm18 = vcmask 7168
    %s19 = scalar_lea.vmem %s1, 2
    %20 = vst.msk [vmem:[%s19] ss:$16 sm:$0x3] %vm18, %v17
    %v21 = vld [vmem:[#allocation0] sm:$0x3]
    %22 = vrot.lane.b32.xlu0 %v21, 125
    %v23 = vpop.permute.xlu0 %22
    %vm24 = vcmask 7168
    %s25 = scalar_lea.vmem %s1, 3
    %26 = vst.msk [vmem:[%s25] ss:$16 sm:$0x3] %vm24, %v23
    %v27 = vld [vmem:[#allocation0] sm:$0x3]
    %28 = vrot.lane.b32.xlu0 %v27, 124
    %v29 = vpop.permute.xlu0 %28
    %vm30 = vcmask 7168
    %s31 = scalar_lea.vmem %s1, 4
    %32 = vst.msk [vmem:[%s31] ss:$16 sm:$0x3] %vm30, %v29
    %v33 = vld [vmem:[#allocation0] sm:$0x3]
    %34 = vrot.lane.b32.xlu0 %v33, 123
    %v35 = vpop.permute.xlu0 %34
    %vm36 = vcmask 7168
    %s37 = scalar_lea.vmem %s1, 5
    %38 = vst.msk [vmem:[%s37] ss:$16 sm:$0x3] %vm36, %v35
    %v39 = vld [vmem:[#allocation0] sm:$0x3]
    %40 = vrot.lane.b32.xlu0 %v39, 122
    %v41 = vpop.permute.xlu0 %40
    %vm42 = vcmask 7168
    %s43 = scalar_lea.vmem %s1, 6
    %44 = vst.msk [vmem:[%s43] ss:$16 sm:$0x3] %vm42, %v41
    %v45 = vld [vmem:[#allocation0] sm:$0x3]
    %46 = vrot.lane.b32.xlu0 %v45, 121
    %v47 = vpop.permute.xlu0 %46
    %vm48 = vcmask 7168
    %s49 = scalar_lea.vmem %s1, 7
    %50 = vst.msk [vmem:[%s49] ss:$16 sm:$0x3] %vm48, %v47
    %v51 = vld [vmem:[#allocation0] sm:$0x3]
    %52 = vrot.lane.b32.xlu0 %v51, 120
    %v53 = vpop.permute.xlu0 %52
    %vm54 = vcmask 7168
    %s55 = scalar_lea.vmem %s1, 8
    %56 = vst.msk [vmem:[%s55] ss:$16 sm:$0x3] %vm54, %v53
    %v57 = vld [vmem:[#allocation0] sm:$0x3]
    %58 = vrot.lane.b32.xlu0 %v57, 119
    %v59 = vpop.permute.xlu0 %58
    %vm60 = vcmask 7168
    %s61 = scalar_lea.vmem %s1, 9
    %62 = vst.msk [vmem:[%s61] ss:$16 sm:$0x3] %vm60, %v59
    %v63 = vld [vmem:[#allocation0] sm:$0x3]
    %64 = vrot.lane.b32.xlu0 %v63, 118
    %v65 = vpop.permute.xlu0 %64
    %vm66 = vcmask 7168
    %s67 = scalar_lea.vmem %s1, 10
    %68 = vst.msk [vmem:[%s67] ss:$16 sm:$0x3] %vm66, %v65
    %v69 = vld [vmem:[#allocation0] sm:$0x3]
    %70 = vrot.lane.b32.xlu0 %v69, 117
    %v71 = vpop.permute.xlu0 %70
    %vm72 = vcmask 7168
    %s73 = scalar_lea.vmem %s1, 11
    %74 = vst.msk [vmem:[%s73] ss:$16 sm:$0x3] %vm72, %v71
    %v75 = vld [vmem:[#allocation0] sm:$0x3]
    %76 = vrot.lane.b32.xlu0 %v75, 116
    %v77 = vpop.permute.xlu0 %76
    %vm78 = vcmask 7168
    %s79 = scalar_lea.vmem %s1, 12
    %80 = vst.msk [vmem:[%s79] ss:$16 sm:$0x3] %vm78, %v77
    %v81 = vld [vmem:[#allocation0] sm:$0x3]
    %82 = vrot.lane.b32.xlu0 %v81, 115
    %v83 = vpop.permute.xlu0 %82
    %vm84 = vcmask 7168
    %s85 = scalar_lea.vmem %s1, 13
    %86 = vst.msk [vmem:[%s85] ss:$16 sm:$0x3] %vm84, %v83
    %v87 = vld [vmem:[#allocation0] sm:$0x3]
    %88 = vrot.lane.b32.xlu0 %v87, 114
    %v89 = vpop.permute.xlu0 %88
    %vm90 = vcmask 7168
    %s91 = scalar_lea.vmem %s1, 14
    %92 = vst.msk [vmem:[%s91] ss:$16 sm:$0x3] %vm90, %v89
    %v93 = vld [vmem:[#allocation0] sm:$0x3]
    %94 = vrot.lane.b32.xlu0 %v93, 113
    %v95 = vpop.permute.xlu0 %94
    %vm96 = vcmask 7168
    %s97 = scalar_lea.vmem %s1, 15
    %98 = vst.msk [vmem:[%s97] ss:$16 sm:$0x3] %vm96, %v95

// kernel: conv_bn_relu_3d.3
$region0: #{conv_bn_relu_3d.3}
  #allocation0 [shape = 'u32[]', space=smem, size = 0x4, offset = 0x4, fixed_abs, tag = 'smem constant byte address 0x4 - core index']
  #allocation1 [shape = 'u32[72,128]{1,0:T(1,128)}', space=vmem, size = 0x9000, scoped, tag = 'internal scratch']
  %s0 = inlined_call_operand.vmem [shape: f32[32,512], index: 0, kind: input, shape index: {}, may-alias: {0,3}]
  %s1 = inlined_call_operand.vmem [shape: f32[32,1], index: 1, kind: input, shape index: {}]
  %s2 = inlined_call_operand.vmem [shape: f32[32,1], index: 2, kind: input, shape index: {}]
  %s3 = inlined_call_operand.vmem [shape: f32[32,512], index: 3, kind: output, shape index: {}, may-alias: {0,3}]
  %s4 = sld [smem:[#allocation0]]
  $region22: #{conv_bn_relu_3d.3} parent=0
    _
  %s6 = ssub.s32 1, %s4
  %s7 = scalar_select 0, %s6, %s4
  // Predicated region
  $region2: #{conv_bn_relu_3d.3} parent=0 // pred_check
    _
  $region3: #{conv_bn_relu_3d.3} parent=0 // pred_check_branch
    %9 = sbr.rel (0) target = $region5
  $region4: #{conv_bn_relu_3d.3} parent=0 // pred_region
    _
  $region5: #{conv_bn_relu_3d.3} parent=0 // pred_fallthru
    _
  // Predicated region
  $region6: #{conv_bn_relu_3d.3} parent=0 // pred_check
    _
  $region7: #{conv_bn_relu_3d.3} parent=0 // pred_check_branch
    %11 = sbr.rel (0) target = $region9
  $region8: #{conv_bn_relu_3d.3} parent=0 // pred_region
    _
  $region9: #{conv_bn_relu_3d.3} parent=0 // pred_fallthru
    _
  // Predicated region
  $region10: #{conv_bn_relu_3d.3} parent=0 // pred_check
    _
  $region11: #{conv_bn_relu_3d.3} parent=0 // pred_check_branch
    %13 = sbr.rel (0) target = $region13
  $region12: #{conv_bn_relu_3d.3} parent=0 // pred_region
    _
  $region13: #{conv_bn_relu_3d.3} parent=0 // pred_fallthru
    _
  %v14 = vld [vmem:[%s0] sm:$0xff]
  %v15 = vld [vmem:[%s0 + $0x8] sm:$0xff]
  %v16 = vld [vmem:[%s0 + $0x10] sm:$0xff]
  %v17 = vld [vmem:[%s0 + $0x18] sm:$0xff]
  %v18 = vld [vmem:[%s0 + $0x20] sm:$0xff]
  %v19 = vld [vmem:[%s0 + $0x28] sm:$0xff]
  %v20 = vld [vmem:[%s0 + $0x30] sm:$0xff]
  %v21 = vld [vmem:[%s0 + $0x38] sm:$0xff]
  %v22 = vld [vmem:[%s0 + $0x40] sm:$0xff]
  %v23 = vld [vmem:[%s0 + $0x48] sm:$0xff]
  %v24 = vld [vmem:[%s0 + $0x50] sm:$0xff]
  %v25 = vld [vmem:[%s0 + $0x58] sm:$0xff]
  %v26 = vld [vmem:[%s0 + $0x60] sm:$0xff]
  %v27 = vld [vmem:[%s0 + $0x68] sm:$0xff]
  %v28 = vld [vmem:[%s0 + $0x70] sm:$0xff]
  %v29 = vld [vmem:[%s0 + $0x78] sm:$0xff]
  %v30 = vld [vmem:[%s1] sm:$0xff]
  %v31 = vld [vmem:[%s1 + $0x8] sm:$0xff]
  %v32 = vld [vmem:[%s1 + $0x10] sm:$0xff]
  %v33 = vld [vmem:[%s1 + $0x18] sm:$0xff]
  %35 = vset.pattern.permute.xlu0 0
  %36 = vperm.xlu0 %35, %v30
  %v37 = vpop.permute.xlu0 %36
  %40 = vset.pattern.permute.xlu0 0
  %41 = vperm.xlu0 %40, %v31
  %v42 = vpop.permute.xlu0 %41
  %45 = vset.pattern.permute.xlu0 0
  %46 = vperm.xlu0 %45, %v32
  %v47 = vpop.permute.xlu0 %46
  %50 = vset.pattern.permute.xlu0 0
  %51 = vperm.xlu0 %50, %v33
  %v52 = vpop.permute.xlu0 %51
  %v54 = vmul.f32 %v14, %v37
  %v55 = vmul.f32 %v15, %v37
  %v56 = vmul.f32 %v16, %v37
  %v57 = vmul.f32 %v17, %v37
  %v58 = vmul.f32 %v18, %v42
  %v59 = vmul.f32 %v19, %v42
  %v60 = vmul.f32 %v20, %v42
  %v61 = vmul.f32 %v21, %v42
  %v62 = vmul.f32 %v22, %v47
  %v63 = vmul.f32 %v23, %v47
  %v64 = vmul.f32 %v24, %v47
  %v65 = vmul.f32 %v25, %v47
  %v66 = vmul.f32 %v26, %v52
  %v67 = vmul.f32 %v27, %v52
  %v68 = vmul.f32 %v28, %v52
  %v69 = vmul.f32 %v29, %v52
  %v70 = vld [vmem:[%s2] sm:$0xff]
  %v71 = vld [vmem:[%s2 + $0x8] sm:$0xff]
  %v72 = vld [vmem:[%s2 + $0x10] sm:$0xff]
  %v73 = vld [vmem:[%s2 + $0x18] sm:$0xff]
  %75 = vset.pattern.permute.xlu0 0
  %76 = vperm.xlu0 %75, %v70
  %v77 = vpop.permute.xlu0 %76
  %80 = vset.pattern.permute.xlu0 0
  %81 = vperm.xlu0 %80, %v71
  %v82 = vpop.permute.xlu0 %81
  %85 = vset.pattern.permute.xlu0 0
  %86 = vperm.xlu0 %85, %v72
  %v87 = vpop.permute.xlu0 %86
  %90 = vset.pattern.permute.xlu0 0
  %91 = vperm.xlu0 %90, %v73
  %v92 = vpop.permute.xlu0 %91
  %v94 = vadd.f32 %v54, %v77
  %v95 = vadd.f32 %v55, %v77
  %v96 = vadd.f32 %v56, %v77
  %v97 = vadd.f32 %v57, %v77
  %v98 = vadd.f32 %v58, %v82
  %v99 = vadd.f32 %v59, %v82
  %v100 = vadd.f32 %v60, %v82
  %v101 = vadd.f32 %v61, %v82
  %v102 = vadd.f32 %v62, %v87
  %v103 = vadd.f32 %v63, %v87
  %v104 = vadd.f32 %v64, %v87
  %v105 = vadd.f32 %v65, %v87
  %v106 = vadd.f32 %v66, %v92
  %v107 = vadd.f32 %v67, %v92
  %v108 = vadd.f32 %v68, %v92
  %v109 = vadd.f32 %v69, %v92
  %v110 = vmax.f32 %v94, 0.0
  %v111 = vmax.f32 %v95, 0.0
  %v112 = vmax.f32 %v96, 0.0
  %v113 = vmax.f32 %v97, 0.0
  %v114 = vmax.f32 %v98, 0.0
  %v115 = vmax.f32 %v99, 0.0
  %v116 = vmax.f32 %v100, 0.0
  %v117 = vmax.f32 %v101, 0.0
  %v118 = vmax.f32 %v102, 0.0
  %v119 = vmax.f32 %v103, 0.0
  %v120 = vmax.f32 %v104, 0.0
  %v121 = vmax.f32 %v105, 0.0
  %v122 = vmax.f32 %v106, 0.0
  %v123 = vmax.f32 %v107, 0.0
  %v124 = vmax.f32 %v108, 0.0
  %v125 = vmax.f32 %v109, 0.0
  %126 = vst [vmem:[%s3] sm:$0xff] %v110
  %127 = vst [vmem:[%s3 + $0x8] sm:$0xff] %v111
  %128 = vst [vmem:[%s3 + $0x10] sm:$0xff] %v112
  %129 = vst [vmem:[%s3 + $0x18] sm:$0xff] %v113
  %130 = vst [vmem:[%s3 + $0x20] sm:$0xff] %v114
  %131 = vst [vmem:[%s3 + $0x28] sm:$0xff] %v115
  %132 = vst [vmem:[%s3 + $0x30] sm:$0xff] %v116
  %133 = vst [vmem:[%s3 + $0x38] sm:$0xff] %v117
  %134 = vst [vmem:[%s3 + $0x40] sm:$0xff] %v118
  %135 = vst [vmem:[%s3 + $0x48] sm:$0xff] %v119
  %136 = vst [vmem:[%s3 + $0x50] sm:$0xff] %v120
  %137 = vst [vmem:[%s3 + $0x58] sm:$0xff] %v121
  %138 = vst [vmem:[%s3 + $0x60] sm:$0xff] %v122
  %139 = vst [vmem:[%s3 + $0x68] sm:$0xff] %v123
  %140 = vst [vmem:[%s3 + $0x70] sm:$0xff] %v124
  %141 = vst [vmem:[%s3 + $0x78] sm:$0xff] %v125
  // Predicated region
  $region14: #{conv_bn_relu_3d.3} parent=0 // pred_check
    _
  $region15: #{conv_bn_relu_3d.3} parent=0 // pred_check_branch
    %143 = sbr.rel (0) target = $region17
  $region16: #{conv_bn_relu_3d.3} parent=0 // pred_region
    _
  $region17: #{conv_bn_relu_3d.3} parent=0 // pred_fallthru
    _
  // Predicated region
  $region18: #{conv_bn_relu_3d.3} parent=0 // pred_check
    _
  $region19: #{conv_bn_relu_3d.3} parent=0 // pred_check_branch
    %145 = sbr.rel (0) target = $region21
  $region20: #{conv_bn_relu_3d.3} parent=0 // pred_region
    _
  $region21: #{conv_bn_relu_3d.3} parent=0 // pred_fallthru
    _

// kernel: conv_bn_relu_3d.2
$region0: #{conv_bn_relu_3d.2}
  #allocation0 [shape = 'u32[]', space=smem, size = 0x4, offset = 0x4, fixed_abs, tag = 'smem constant byte address 0x4 - core index']
  #allocation1 [shape = 'u32[72,128]{1,0:T(1,128)}', space=vmem, size = 0x9000, scoped, tag = 'internal scratch']
  #allocation2 [shape = 'f32[8,384]{1,0:T(8,128)}', space=vmem, size = 0x3000, scoped, tag = 'scratch operand']
  #allocation3 [shape = 'f32[72,128]{1,0:T(8,128)}', space=vmem, size = 0x9000, scoped, tag = 'scratch operand']
  %s0 = inlined_call_operand.vmem [shape: s32[3,128], index: 0, kind: input, shape index: {}]
  %s1 = inlined_call_operand.vmem [shape: f32[2,8,512], index: 1, kind: input, shape index: {}, may-alias: {1,2,3}]
  %s2 = inlined_call_operand.vmem [shape: f32[2,8,512], index: 2, kind: input, shape index: {}, may-alias: {1,2,3}]
  %s3 = inlined_call_operand.vmem [shape: f32[2,8,512], index: 3, kind: input, shape index: {}, may-alias: {1,2,3}]
  %s4 = inlined_call_operand.vmem [shape: f32[3,16,72], index: 4, kind: input, shape index: {}]
  %s5 = inlined_call_operand.vmem [shape: f32[2,16,512], index: 5, kind: output, shape index: {0}]
  %s6 = inlined_call_operand.vmem [shape: f32[2,4,1,16], index: 6, kind: output, shape index: {1}]
  %s7 = inlined_call_operand.vmem [shape: f32[2,4,1,16], index: 7, kind: output, shape index: {2}]
  %8 = xla_tuple %s5, %s6, %s7
  %s9 = sld [smem:[#allocation0]]
  $region103: #{conv_bn_relu_3d.2} parent=0
    _
  %s11 = ssub.s32 1, %s9
  %s12 = scalar_select 0, %s11, %s9
  $region1: #{conv_bn_relu_3d.2} parent=0
    #allocation4 [shape = 'u8[16384]{0}', space=vmem, size = 0x4000, scoped, tag = 'output window, operand 0']
    loop: start=0, step=1, limit=10
    $region2: #{conv_bn_relu_3d.2} parent=1 // loop_pre_header
      _
    $region3: #{conv_bn_relu_3d.2} parent=1 // loop_header
      %s14 = sphi 0, %s18
      %p15 = scmp.ge.s32.totalorder %s14, 10
      %s21 = sphi 0, %s33
      %s22 = sphi 0, %s29
      %s23 = sphi 0, %s21
      %s24 = sphi 0, %s22
      %s25 = sphi 0, %s23
      %s26 = sphi 0, %s24
      %s34 = sphi 0, %s34
      %s36 = sphi 0, %s34
      %s37 = sphi 0, %s36
      %s51 = sphi 0, %s37
      %s65 = sphi 0, %s67
      %s68 = sphi 0, %s65
      %s69 = sphi 0, %s68
      %s85 = sphi 0, %s69
      %s93 = sphi 0, %s95
      %s96 = sphi 0, %s93
      %s97 = sphi 0, %s96
      %s113 = sphi 0, %s97
      %s127 = sphi 0, %s129
      %s130 = sphi 0, %s127
      %s131 = sphi 0, %s130
      %s147 = sphi 0, %s131
      %s151 = sphi 0, %s151
      %s153 = sphi 0, %s151
      %s154 = sphi 0, %s153
      %s168 = sphi 0, %s154
      %s176 = sphi 0, %s178
      %s179 = sphi 0, %s176
      %s180 = sphi 0, %s179
      %s196 = sphi 0, %s180
      %s204 = sphi 0, %s206
      %s207 = sphi 0, %s204
      %s208 = sphi 0, %s207
      %s224 = sphi 0, %s208
      %s232 = sphi 0, %s234
      %s235 = sphi 0, %s232
      %s236 = sphi 0, %s235
      %s252 = sphi 0, %s236
    $region4: #{conv_bn_relu_3d.2} parent=1 // loop_header_branch
      %17 = sbr.rel (%p15) target = $region8
    $region5: #{conv_bn_relu_3d.2} parent=1 // loop_body
      %s19 = ssub.s32 %s14, 1
      %s20 = ssub.s32 %s14, 2
      %s27 = sadd.s32 1, %s22
      %p28 = scmp.ge.s32.totalorder %s27, 4
      %s29 = scalar_select %p28, 0, %s27
      %s30 = sadd.s32 1, %s21
      %s31 = scalar_select %p28, %s30, %s21
      %p32 = scmp.ge.s32.totalorder %s31, 2
      %s33 = scalar_select %p32, 0, %s31
      %s35 = sadd.s32 %s34, 1
      %p38 = scmp.eq.s32.totalorder %s14, 7
      %p39 = scmp.ne.s32.totalorder %s34, %s36
      %p40 = scmp.eq.s32.totalorder %s14, 0
      %p41 = por %p39, %p40
      %p42 = scmp.ne.s32.totalorder %s34, %s36
      %p43 = scmp.eq.s32.totalorder %s19, 7
      %p44 = por %p42, %p43
      %p45 = scmp.ne.s32.totalorder %s36, %s37
      %p46 = scmp.eq.s32.totalorder %s19, 0
      %p47 = por %p45, %p46
      %p48 = scmp.ne.s32.totalorder %s36, %s37
      %p49 = scmp.eq.s32.totalorder %s20, 7
      %p50 = por %p48, %p49
      %p52 = scmp.ne.s32.totalorder %s37, %s51
      %p53 = scmp.eq.s32.totalorder %s20, 0
      %p54 = por %p52, %p53
      %s55 = ssub.s32 %s22, 1
      %p56 = scmp.gt.s32.totalorder %s55, 0
      %s57 = scalar_select %p56, %s55, 0
      %s58 = ssub.s32 %s29, 1
      %p59 = scmp.gt.s32.totalorder %s58, 0
      %s60 = scalar_select %p59, %s58, 0
      %s61 = ssub.s32 %s21, %s33
      %s62 = ssub.s32 %s57, %s60
      %s63 = sor.u32 %s61, %s62
      %p64 = scmp.eq.s32.totalorder %s63, 0
      %s66 = sadd.s32 %s65, 1
      %s67 = scalar_select %p64, %s65, %s66
      %p70 = pneg %p64
      %p71 = scmp.eq.s32.totalorder %s14, 7
      %p72 = por %p70, %p71
      %p73 = scmp.ne.s32.totalorder %s65, %s68
      %p74 = scmp.eq.s32.totalorder %s14, 0
      %p75 = por %p73, %p74
      %p76 = scmp.ne.s32.totalorder %s65, %s68
      %p77 = scmp.eq.s32.totalorder %s19, 7
      %p78 = por %p76, %p77
      %p79 = scmp.ne.s32.totalorder %s68, %s69
      %p80 = scmp.eq.s32.totalorder %s19, 0
      %p81 = por %p79, %p80
      %p82 = scmp.ne.s32.totalorder %s68, %s69
      %p83 = scmp.eq.s32.totalorder %s20, 7
      %p84 = por %p82, %p83
      %p86 = scmp.ne.s32.totalorder %s69, %s85
      %p87 = scmp.eq.s32.totalorder %s20, 0
      %p88 = por %p86, %p87
      %s89 = ssub.s32 %s21, %s33
      %s90 = ssub.s32 %s22, %s29
      %s91 = sor.u32 %s89, %s90
      %p92 = scmp.eq.s32.totalorder %s91, 0
      %s94 = sadd.s32 %s93, 1
      %s95 = scalar_select %p92, %s93, %s94
      %p98 = pneg %p92
      %p99 = scmp.eq.s32.totalorder %s14, 7
      %p100 = por %p98, %p99
      %p101 = scmp.ne.s32.totalorder %s93, %s96
      %p102 = scmp.eq.s32.totalorder %s14, 0
      %p103 = por %p101, %p102
      %p104 = scmp.ne.s32.totalorder %s93, %s96
      %p105 = scmp.eq.s32.totalorder %s19, 7
      %p106 = por %p104, %p105
      %p107 = scmp.ne.s32.totalorder %s96, %s97
      %p108 = scmp.eq.s32.totalorder %s19, 0
      %p109 = por %p107, %p108
      %p110 = scmp.ne.s32.totalorder %s96, %s97
      %p111 = scmp.eq.s32.totalorder %s20, 7
      %p112 = por %p110, %p111
      %p114 = scmp.ne.s32.totalorder %s97, %s113
      %p115 = scmp.eq.s32.totalorder %s20, 0
      %p116 = por %p114, %p115
      %s117 = sadd.s32 %s22, 1
      %p118 = scmp.lt.s32.totalorder %s117, 3
      %s119 = scalar_select %p118, %s117, 3
      %s120 = sadd.s32 %s29, 1
      %p121 = scmp.lt.s32.totalorder %s120, 3
      %s122 = scalar_select %p121, %s120, 3
      %s123 = ssub.s32 %s21, %s33
      %s124 = ssub.s32 %s119, %s122
      %s125 = sor.u32 %s123, %s124
      %p126 = scmp.eq.s32.totalorder %s125, 0
      %s128 = sadd.s32 %s127, 1
      %s129 = scalar_select %p126, %s127, %s128
      %p132 = pneg %p126
      %p133 = scmp.eq.s32.totalorder %s14, 7
      %p134 = por %p132, %p133
      %p135 = scmp.ne.s32.totalorder %s127, %s130
      %p136 = scmp.eq.s32.totalorder %s14, 0
      %p137 = por %p135, %p136
      %p138 = scmp.ne.s32.totalorder %s127, %s130
      %p139 = scmp.eq.s32.totalorder %s19, 7
      %p140 = por %p138, %p139
      %p141 = scmp.ne.s32.totalorder %s130, %s131
      %p142 = scmp.eq.s32.totalorder %s19, 0
      %p143 = por %p141, %p142
      %p144 = scmp.ne.s32.totalorder %s130, %s131
      %p145 = scmp.eq.s32.totalorder %s20, 7
      %p146 = por %p144, %p145
      %p148 = scmp.ne.s32.totalorder %s131, %s147
      %p149 = scmp.eq.s32.totalorder %s20, 0
      %p150 = por %p148, %p149
      %s152 = sadd.s32 %s151, 1
      %p155 = scmp.eq.s32.totalorder %s14, 7
      %p156 = scmp.ne.s32.totalorder %s151, %s153
      %p157 = scmp.eq.s32.totalorder %s14, 0
      %p158 = por %p156, %p157
      %p159 = scmp.ne.s32.totalorder %s151, %s153
      %p160 = scmp.eq.s32.totalorder %s19, 7
      %p161 = por %p159, %p160
      %p162 = scmp.ne.s32.totalorder %s153, %s154
      %p163 = scmp.eq.s32.totalorder %s19, 0
      %p164 = por %p162, %p163
      %p165 = scmp.ne.s32.totalorder %s153, %s154
      %p166 = scmp.eq.s32.totalorder %s20, 7
      %p167 = por %p165, %p166
      %p169 = scmp.ne.s32.totalorder %s154, %s168
      %p170 = scmp.eq.s32.totalorder %s20, 0
      %p171 = por %p169, %p170
      %s172 = ssub.s32 %s21, %s33
      %s173 = ssub.s32 %s22, %s29
      %s174 = sor.u32 %s172, %s173
      %p175 = scmp.eq.s32.totalorder %s174, 0
      %s177 = sadd.s32 %s176, 1
      %s178 = scalar_select %p175, %s176, %s177
      %p181 = pneg %p175
      %p182 = scmp.eq.s32.totalorder %s14, 7
      %p183 = por %p181, %p182
      %p184 = scmp.ne.s32.totalorder %s176, %s179
      %p185 = scmp.eq.s32.totalorder %s14, 0
      %p186 = por %p184, %p185
      %p187 = scmp.ne.s32.totalorder %s176, %s179
      %p188 = scmp.eq.s32.totalorder %s19, 7
      %p189 = por %p187, %p188
      %p190 = scmp.ne.s32.totalorder %s179, %s180
      %p191 = scmp.eq.s32.totalorder %s19, 0
      %p192 = por %p190, %p191
      %p193 = scmp.ne.s32.totalorder %s179, %s180
      %p194 = scmp.eq.s32.totalorder %s20, 7
      %p195 = por %p193, %p194
      %p197 = scmp.ne.s32.totalorder %s180, %s196
      %p198 = scmp.eq.s32.totalorder %s20, 0
      %p199 = por %p197, %p198
      %s200 = ssub.s32 %s21, %s33
      %s201 = ssub.s32 %s22, %s29
      %s202 = sor.u32 %s200, %s201
      %p203 = scmp.eq.s32.totalorder %s202, 0
      %s205 = sadd.s32 %s204, 1
      %s206 = scalar_select %p203, %s204, %s205
      %p209 = pneg %p203
      %p210 = scmp.eq.s32.totalorder %s14, 7
      %p211 = por %p209, %p210
      %p212 = scmp.ne.s32.totalorder %s204, %s207
      %p213 = scmp.eq.s32.totalorder %s14, 0
      %p214 = por %p212, %p213
      %p215 = scmp.ne.s32.totalorder %s204, %s207
      %p216 = scmp.eq.s32.totalorder %s19, 7
      %p217 = por %p215, %p216
      %p218 = scmp.ne.s32.totalorder %s207, %s208
      %p219 = scmp.eq.s32.totalorder %s19, 0
      %p220 = por %p218, %p219
      %p221 = scmp.ne.s32.totalorder %s207, %s208
      %p222 = scmp.eq.s32.totalorder %s20, 7
      %p223 = por %p221, %p222
      %p225 = scmp.ne.s32.totalorder %s208, %s224
      %p226 = scmp.eq.s32.totalorder %s20, 0
      %p227 = por %p225, %p226
      %s228 = ssub.s32 %s21, %s33
      %s229 = ssub.s32 %s22, %s29
      %s230 = sor.u32 %s228, %s229
      %p231 = scmp.eq.s32.totalorder %s230, 0
      %s233 = sadd.s32 %s232, 1
      %s234 = scalar_select %p231, %s232, %s233
      %p237 = pneg %p231
      %p238 = scmp.eq.s32.totalorder %s14, 7
      %p239 = por %p237, %p238
      %p240 = scmp.ne.s32.totalorder %s232, %s235
      %p241 = scmp.eq.s32.totalorder %s14, 0
      %p242 = por %p240, %p241
      %p243 = scmp.ne.s32.totalorder %s232, %s235
      %p244 = scmp.eq.s32.totalorder %s19, 7
      %p245 = por %p243, %p244
      %p246 = scmp.ne.s32.totalorder %s235, %s236
      %p247 = scmp.eq.s32.totalorder %s19, 0
      %p248 = por %p246, %p247
      %p249 = scmp.ne.s32.totalorder %s235, %s236
      %p250 = scmp.eq.s32.totalorder %s20, 7
      %p251 = por %p249, %p250
      %p253 = scmp.ne.s32.totalorder %s236, %s252
      %p254 = scmp.eq.s32.totalorder %s20, 0
      %p255 = por %p253, %p254
      %p256 = scmp.le.s32.totalorder 1, %s14
      %p257 = scmp.lt.s32.totalorder %s14, 9
      %p258 = pnand %p256, %p257
      %p259 = pneg %p258
      // Predicated region
      $region9: #{conv_bn_relu_3d.2} parent=5 // pred_check
        _
      $region10: #{conv_bn_relu_3d.2} parent=5 // pred_check_branch
        %261 = sbr.rel (%p258) target = $region12
      $region11: #{conv_bn_relu_3d.2} parent=5 // pred_region
        %s262 = ssub.s32 %s14, 1
        // Predicated region
        $region13: #{conv_bn_relu_3d.2} parent=11 // pred_check
          %p263 = pneg %p47
        $region14: #{conv_bn_relu_3d.2} parent=11 // pred_check_branch
          %265 = sbr.rel (%p263) target = $region16
        $region15: #{conv_bn_relu_3d.2} parent=11 // pred_region
          _
        $region16: #{conv_bn_relu_3d.2} parent=11 // pred_fallthru
          _
        // Predicated region
        $region17: #{conv_bn_relu_3d.2} parent=11 // pred_check
          %p266 = pneg %p164
        $region18: #{conv_bn_relu_3d.2} parent=11 // pred_check_branch
          %268 = sbr.rel (%p266) target = $region20
        $region19: #{conv_bn_relu_3d.2} parent=11 // pred_region
          _
        $region20: #{conv_bn_relu_3d.2} parent=11 // pred_fallthru
          _
      $region12: #{conv_bn_relu_3d.2} parent=5 // pred_fallthru
        _
      %p269 = scmp.lt.s32.totalorder %s14, 8
      // Predicated region
      $region21: #{conv_bn_relu_3d.2} parent=5 // pred_check
        %p270 = pneg %p269
      $region22: #{conv_bn_relu_3d.2} parent=5 // pred_check_branch
        %272 = sbr.rel (%p270) target = $region24
      $region23: #{conv_bn_relu_3d.2} parent=5 // pred_region
        // Predicated region
        $region25: #{conv_bn_relu_3d.2} parent=23 // pred_check
          %p273 = pneg %p75
        $region26: #{conv_bn_relu_3d.2} parent=23 // pred_check_branch
          %275 = sbr.rel (%p273) target = $region28
        $region27: #{conv_bn_relu_3d.2} parent=23 // pred_region
          %s276 = ssub.s32 %s22, 1
          %p277 = scmp.gt.s32.totalorder %s276, 0
          %s278 = scalar_select %p277, %s276, 0
          %p279 = scmp.lt.s32.totalorder %s21, 1
          %s280 = scalar_select %p279, %s21, 1
          %p281 = scmp.lt.s32.totalorder %s278, 3
          %s282 = scalar_select %p281, %s278, 3
          %s283 = smul.addr %s280, 4
          %s284 = sadd.s32 %s282, %s283
          %s285 = smul.addr %s284, 8
          %s286 = scalar_lea.vmem %s1, %s285
          %s287 = ssub.s32 %s22, 1
          %p288 = scmp.gt.s32.totalorder %s287, 0
          %s289 = scalar_select %p288, %s287, 0
        $region28: #{conv_bn_relu_3d.2} parent=23 // pred_fallthru
          _
        // Predicated region
        $region29: #{conv_bn_relu_3d.2} parent=23 // pred_check
          %p290 = pneg %p103
        $region30: #{conv_bn_relu_3d.2} parent=23 // pred_check_branch
          %292 = sbr.rel (%p290) target = $region32
        $region31: #{conv_bn_relu_3d.2} parent=23 // pred_region
          %p293 = scmp.lt.s32.totalorder %s21, 1
          %s294 = scalar_select %p293, %s21, 1
          %p295 = scmp.lt.s32.totalorder %s22, 3
          %s296 = scalar_select %p295, %s22, 3
          %s297 = smul.addr %s294, 4
          %s298 = sadd.s32 %s296, %s297
          %s299 = smul.addr %s298, 8
          %s300 = scalar_lea.vmem %s2, %s299
        $region32: #{conv_bn_relu_3d.2} parent=23 // pred_fallthru
          _
        // Predicated region
        $region33: #{conv_bn_relu_3d.2} parent=23 // pred_check
          %p301 = pneg %p137
        $region34: #{conv_bn_relu_3d.2} parent=23 // pred_check_branch
          %303 = sbr.rel (%p301) target = $region36
        $region35: #{conv_bn_relu_3d.2} parent=23 // pred_region
          %s304 = sadd.s32 %s22, 1
          %p305 = scmp.lt.s32.totalorder %s304, 3
          %s306 = scalar_select %p305, %s304, 3
          %p307 = scmp.lt.s32.totalorder %s21, 1
          %s308 = scalar_select %p307, %s21, 1
          %p309 = scmp.lt.s32.totalorder %s306, 3
          %s310 = scalar_select %p309, %s306, 3
          %s311 = smul.addr %s308, 4
          %s312 = sadd.s32 %s310, %s311
          %s313 = smul.addr %s312, 8
          %s314 = scalar_lea.vmem %s3, %s313
          %s315 = sadd.s32 %s22, 1
          %p316 = scmp.lt.s32.totalorder %s315, 3
          %s317 = scalar_select %p316, %s315, 3
        $region36: #{conv_bn_relu_3d.2} parent=23 // pred_fallthru
          _
      $region24: #{conv_bn_relu_3d.2} parent=5 // pred_fallthru
        _
      %p318 = scmp.le.s32.totalorder 1, %s14
      %p319 = scmp.lt.s32.totalorder %s14, 9
      %p320 = pnand %p318, %p319
      %p321 = pneg %p320
      // Predicated region
      $region37: #{conv_bn_relu_3d.2} parent=5 // pred_check
        _
      $region38: #{conv_bn_relu_3d.2} parent=5 // pred_check_branch
        %323 = sbr.rel (%p320) target = $region40
      $region39: #{conv_bn_relu_3d.2} parent=5 // pred_region
        %s324 = ssub.s32 %s14, 1
        %p325 = pneg %p47
        %p326 = pneg %p44
        %s327 = ssub.s32 %s24, 1
        %p328 = scmp.gt.s32.totalorder %s327, 0
        %s329 = scalar_select %p328, %s327, 0
        %p330 = scmp.lt.s32.totalorder %s23, 1
        %s331 = scalar_select %p330, %s23, 1
        %p332 = scmp.lt.s32.totalorder %s329, 3
        %s333 = scalar_select %p332, %s329, 3
        %s334 = smul.addr %s331, 4
        %s335 = sadd.s32 %s333, %s334
        %s336 = smul.addr %s335, 8
        %s337 = scalar_lea.vmem %s1, %s336
        %p338 = pneg %p81
        %p339 = pneg %p78
        %p340 = scmp.lt.s32.totalorder %s23, 1
        %s341 = scalar_select %p340, %s23, 1
        %p342 = scmp.lt.s32.totalorder %s24, 3
        %s343 = scalar_select %p342, %s24, 3
        %s344 = smul.addr %s341, 4
        %s345 = sadd.s32 %s343, %s344
        %s346 = smul.addr %s345, 8
        %s347 = scalar_lea.vmem %s2, %s346
        %p348 = pneg %p109
        %p349 = pneg %p106
        %s350 = sadd.s32 %s24, 1
        %p351 = scmp.lt.s32.totalorder %s350, 3
        %s352 = scalar_select %p351, %s350, 3
        %p353 = scmp.lt.s32.totalorder %s23, 1
        %s354 = scalar_select %p353, %s23, 1
        %p355 = scmp.lt.s32.totalorder %s352, 3
        %s356 = scalar_select %p355, %s352, 3
        %s357 = smul.addr %s354, 4
        %s358 = sadd.s32 %s356, %s357
        %s359 = smul.addr %s358, 8
        %s360 = scalar_lea.vmem %s3, %s359
        %p361 = pneg %p143
        %p362 = pneg %p140
        %p363 = pneg %p164
        %p364 = pneg %p161
        %p365 = pneg %p192
        %p366 = pneg %p189
        %s367 = sand.u32 %s179, 1
        %s368 = sand.u32 %s179, 1
        %s369 = smul.addr %s368, 16
        %s370 = scalar_lea.vmem [#allocation4], %s369
        %p371 = pneg %p220
        %p372 = pneg %p217
        %p373 = scmp.lt.s32.totalorder %s23, 1
        %s374 = scalar_select %p373, %s23, 1
        %p375 = scmp.lt.s32.totalorder %s24, 3
        %s376 = scalar_select %p375, %s24, 3
        %s377 = smul.addr %s374, 4
        %s378 = sadd.s32 %s376, %s377
        %s379 = scalar_lea.vmem %s6, %s378
        %p380 = pneg %p248
        %p381 = pneg %p245
        %p382 = scmp.lt.s32.totalorder %s23, 1
        %s383 = scalar_select %p382, %s23, 1
        %p384 = scmp.lt.s32.totalorder %s24, 3
        %s385 = scalar_select %p384, %s24, 3
        %s386 = smul.addr %s383, 4
        %s387 = sadd.s32 %s385, %s386
        %s388 = scalar_lea.vmem %s7, %s387
        %s389 = ssub.s32 %s24, 1
        %p390 = scmp.gt.s32.totalorder %s389, 0
        %s391 = scalar_select %p390, %s389, 0
        %p392 = scmp.lt.s32.totalorder %s23, 1
        %s393 = scalar_select %p392, %s23, 1
        %p394 = scmp.lt.s32.totalorder %s391, 3
        %s395 = scalar_select %p394, %s391, 3
        %s396 = smul.addr %s393, 4
        %s397 = sadd.s32 %s395, %s396
        %s398 = smul.addr %s397, 8
        %s399 = scalar_lea.vmem %s1, %s398
        %s400 = ssub.s32 %s24, 1
        %p401 = scmp.gt.s32.totalorder %s400, 0
        %s402 = scalar_select %p401, %s400, 0
        %p403 = scmp.lt.s32.totalorder %s23, 1
        %s404 = scalar_select %p403, %s23, 1
        %p405 = scmp.lt.s32.totalorder %s24, 3
        %s406 = scalar_select %p405, %s24, 3
        %s407 = smul.addr %s404, 4
        %s408 = sadd.s32 %s406, %s407
        %s409 = smul.addr %s408, 8
        %s410 = scalar_lea.vmem %s2, %s409
        %s411 = sadd.s32 %s24, 1
        %p412 = scmp.lt.s32.totalorder %s411, 3
        %s413 = scalar_select %p412, %s411, 3
        %p414 = scmp.lt.s32.totalorder %s23, 1
        %s415 = scalar_select %p414, %s23, 1
        %p416 = scmp.lt.s32.totalorder %s413, 3
        %s417 = scalar_select %p416, %s413, 3
        %s418 = smul.addr %s415, 4
        %s419 = sadd.s32 %s417, %s418
        %s420 = smul.addr %s419, 8
        %s421 = scalar_lea.vmem %s3, %s420
        %s422 = sadd.s32 %s24, 1
        %p423 = scmp.lt.s32.totalorder %s422, 3
        %s424 = scalar_select %p423, %s422, 3
        %p425 = scmp.lt.s32.totalorder %s23, 1
        %s426 = scalar_select %p425, %s23, 1
        %p427 = scmp.lt.s32.totalorder %s24, 3
        %s428 = scalar_select %p427, %s24, 3
        %s429 = smul.addr %s426, 4
        %s430 = sadd.s32 %s428, %s429
        %s431 = scalar_lea.vmem %s6, %s430
        %p432 = scmp.lt.s32.totalorder %s23, 1
        %s433 = scalar_select %p432, %s23, 1
        %p434 = scmp.lt.s32.totalorder %s24, 3
        %s435 = scalar_select %p434, %s24, 3
        %s436 = smul.addr %s433, 4
        %s437 = sadd.s32 %s435, %s436
        %s438 = scalar_lea.vmem %s7, %s437
        %v439 = vld [vmem:[%s0] sm:$0x1]
        %v440 = vld [vmem:[%s0 + $0x1] sm:$0x1]
        %v441 = vld [vmem:[%s0 + $0x2] sm:$0x1]
        %s442 = smul.u32 %s24, 2
        %v443 = vstv %s442
        %v444 = vadd.s32 %v441, %v443
        %vm445 = vcmp.ge.s32.totalorder %v439, 1
        %vm446 = vcmp.le.s32.totalorder %v439, 6
        %vm447 = vcmp.ge.s32.totalorder %v440, 1
        %vm448 = vcmp.le.s32.totalorder %v440, 6
        %vm449 = vcmp.ge.s32.totalorder %v444, 1
        %vm450 = vcmp.le.s32.totalorder %v444, 6
        %vm451 = vmand %vm447, %vm445
        %vm452 = vmand %vm447, %vm446
        %vm453 = vmand %vm448, %vm445
        %vm454 = vmand %vm448, %vm446
        %vm455 = vcmask 523264
        %456 = vst.msk [vmem:[#allocation2] sm:$0xff] %vm455, 0.0
        %v457 = vld [vmem:[%s399] sm:$0xff]
        %vm458 = vcmask 1048064
        %459 = vst.msk [vmem:[#allocation2] sm:$0xff] %vm458, %v457
        %v460 = vld [vmem:[%s410] sm:$0xff]
        %461 = vst [vmem:[#allocation2 + $0x8] sm:$0xff] %v460
        %v462 = vld [vmem:[%s421] sm:$0xff]
        %463 = vst.msk [vmem:[#allocation2 + $0x10] sm:$0xff] %vm455, %v462
        %464 = vst.msk [vmem:[#allocation2 + $0x10] sm:$0xff] %vm458, 0.0
        %v465 = vld [vmem:[#allocation2] sm:$0xff]
        %v466 = vld [vmem:[#allocation2 + $0x8] sm:$0xff]
        %vm467 = vmand %vm451, %vm449
        %v468 = vsel %vm467, 1, 0
        %v469 = vperm.slane %v468, 0
        %vm470 = vcmp.eq.s32.totalorder %v469, 1
        %473 = vrot.lane.b32.xlu0 %v465, 73
        %v474 = vpop.permute.xlu0 %473
        %475 = vrot.lane.b32.xlu0 %v466, 73
        %v476 = vpop.permute.xlu0 %475
        %vm477 = vcmask 596992
        %v478 = vsel %vm477, %v474, %v476
        %v480 = vsel %vm470, %v478, 0.0
        %481 = vst [vmem:[#allocation3] sm:$0xff] %v480
        %v482 = vld [vmem:[#allocation2] sm:$0xff]
        %v483 = vld [vmem:[#allocation2 + $0x8] sm:$0xff]
        %vm484 = vmand %vm447, %vm449
        %v485 = vsel %vm484, 1, 0
        %v486 = vperm.slane %v485, 0
        %vm487 = vcmp.eq.s32.totalorder %v486, 1
        %490 = vrot.lane.b32.xlu0 %v482, 72
        %v491 = vpop.permute.xlu0 %490
        %492 = vrot.lane.b32.xlu0 %v483, 72
        %v493 = vpop.permute.xlu0 %492
        %vm494 = vcmask 588800
        %v495 = vsel %vm494, %v491, %v493
        %v497 = vsel %vm487, %v495, 0.0
        %498 = vst [vmem:[#allocation3 + $0x8] sm:$0xff] %v497
        %v499 = vld [vmem:[#allocation2] sm:$0xff]
        %v500 = vld [vmem:[#allocation2 + $0x8] sm:$0xff]
        %vm501 = vmand %vm452, %vm449
        %v502 = vsel %vm501, 1, 0
        %v503 = vperm.slane %v502, 0
        %vm504 = vcmp.eq.s32.totalorder %v503, 1
        %507 = vrot.lane.b32.xlu0 %v499, 71
        %v508 = vpop.permute.xlu0 %507
        %509 = vrot.lane.b32.xlu0 %v500, 71
        %v510 = vpop.permute.xlu0 %509
        %vm511 = vcmask 580608
        %v512 = vsel %vm511, %v508, %v510
        %v514 = vsel %vm504, %v512, 0.0
        %515 = vst [vmem:[#allocation3 + $0x10] sm:$0xff] %v514
        %v516 = vld [vmem:[#allocation2] sm:$0xff]
        %v517 = vld [vmem:[#allocation2 + $0x8] sm:$0xff]
        %vm518 = vmand %vm445, %vm449
        %v519 = vsel %vm518, 1, 0
        %v520 = vperm.slane %v519, 0
        %vm521 = vcmp.eq.s32.totalorder %v520, 1
        %524 = vrot.lane.b32.xlu0 %v516, 65
        %v525 = vpop.permute.xlu0 %524
        %526 = vrot.lane.b32.xlu0 %v517, 65
        %v527 = vpop.permute.xlu0 %526
        %vm528 = vcmask 531456
        %v529 = vsel %vm528, %v525, %v527
        %v531 = vsel %vm521, %v529, 0.0
        %532 = vst [vmem:[#allocation3 + $0x18] sm:$0xff] %v531
        %v533 = vld [vmem:[#allocation2] sm:$0xff]
        %v534 = vld [vmem:[#allocation2 + $0x8] sm:$0xff]
        %v535 = vsel %vm449, 1, 0
        %v536 = vperm.slane %v535, 0
        %vm537 = vcmp.eq.s32.totalorder %v536, 1
        %540 = vrot.lane.b32.xlu0 %v533, 64
        %v541 = vpop.permute.xlu0 %540
        %542 = vrot.lane.b32.xlu0 %v534, 64
        %v543 = vpop.permute.xlu0 %542
        %v544 = vsel %vm455, %v541, %v543
        %v546 = vsel %vm537, %v544, 0.0
        %547 = vst [vmem:[#allocation3 + $0x20] sm:$0xff] %v546
        %v548 = vld [vmem:[#allocation2] sm:$0xff]
        %v549 = vld [vmem:[#allocation2 + $0x8] sm:$0xff]
        %vm550 = vmand %vm446, %vm449
        %v551 = vsel %vm550, 1, 0
        %v552 = vperm.slane %v551, 0
        %vm553 = vcmp.eq.s32.totalorder %v552, 1
        %556 = vrot.lane.b32.xlu0 %v548, 63
        %v557 = vpop.permute.xlu0 %556
        %558 = vrot.lane.b32.xlu0 %v549, 63
        %v559 = vpop.permute.xlu0 %558
        %vm560 = vcmask 515072
        %v561 = vsel %vm560, %v557, %v559
        %v563 = vsel %vm553, %v561, 0.0
        %564 = vst [vmem:[#allocation3 + $0x28] sm:$0xff] %v563
        %v565 = vld [vmem:[#allocation2] sm:$0xff]
        %v566 = vld [vmem:[#allocation2 + $0x8] sm:$0xff]
        %vm567 = vmand %vm453, %vm449
        %v568 = vsel %vm567, 1, 0
        %v569 = vperm.slane %v568, 0
        %vm570 = vcmp.eq.s32.totalorder %v569, 1
        %573 = vrot.lane.b32.xlu0 %v565, 57
        %v574 = vpop.permute.xlu0 %573
        %575 = vrot.lane.b32.xlu0 %v566, 57
        %v576 = vpop.permute.xlu0 %575
        %vm577 = vcmask 465920
        %v578 = vsel %vm577, %v574, %v576
        %v580 = vsel %vm570, %v578, 0.0
        %581 = vst [vmem:[#allocation3 + $0x30] sm:$0xff] %v580
        %v582 = vld [vmem:[#allocation2] sm:$0xff]
        %v583 = vld [vmem:[#allocation2 + $0x8] sm:$0xff]
        %vm584 = vmand %vm448, %vm449
        %v585 = vsel %vm584, 1, 0
        %v586 = vperm.slane %v585, 0
        %vm587 = vcmp.eq.s32.totalorder %v586, 1
        %590 = vrot.lane.b32.xlu0 %v582, 56
        %v591 = vpop.permute.xlu0 %590
        %592 = vrot.lane.b32.xlu0 %v583, 56
        %v593 = vpop.permute.xlu0 %592
        %vm594 = vcmask 457728
        %v595 = vsel %vm594, %v591, %v593
        %v597 = vsel %vm587, %v595, 0.0
        %598 = vst [vmem:[#allocation3 + $0x38] sm:$0xff] %v597
        %v599 = vld [vmem:[#allocation2] sm:$0xff]
        %v600 = vld [vmem:[#allocation2 + $0x8] sm:$0xff]
        %vm601 = vmand %vm454, %vm449
        %v602 = vsel %vm601, 1, 0
        %v603 = vperm.slane %v602, 0
        %vm604 = vcmp.eq.s32.totalorder %v603, 1
        %607 = vrot.lane.b32.xlu0 %v599, 55
        %v608 = vpop.permute.xlu0 %607
        %609 = vrot.lane.b32.xlu0 %v600, 55
        %v610 = vpop.permute.xlu0 %609
        %vm611 = vcmask 449536
        %v612 = vsel %vm611, %v608, %v610
        %v614 = vsel %vm604, %v612, 0.0
        %615 = vst [vmem:[#allocation3 + $0x40] sm:$0xff] %v614
        %v616 = vld [vmem:[%s4] sm:$0xff]
        %v617 = vld [vmem:[%s4 + $0x8] sm:$0xff]
        %v618 = vld [vmem:[#allocation3] sm:$0xff]
        %v619 = vld [vmem:[#allocation3 + $0x8] sm:$0xff]
        %v620 = vld [vmem:[#allocation3 + $0x10] sm:$0xff]
        %v621 = vld [vmem:[#allocation3 + $0x18] sm:$0xff]
        %v622 = vld [vmem:[#allocation3 + $0x20] sm:$0xff]
        %v623 = vld [vmem:[#allocation3 + $0x28] sm:$0xff]
        %v624 = vld [vmem:[#allocation3 + $0x30] sm:$0xff]
        %v625 = vld [vmem:[#allocation3 + $0x38] sm:$0xff]
        %v626 = vld [vmem:[#allocation3 + $0x40] sm:$0xff]
        %v627 = vld [vmem:[#allocation2] sm:$0xff]
        %v628 = vld [vmem:[#allocation2 + $0x8] sm:$0xff]
        %v629 = vsel %vm451, 1, 0
        %v630 = vperm.slane %v629, 0
        %vm631 = vcmp.eq.s32.totalorder %v630, 1
        %634 = vrot.lane.b32.xlu0 %v627, 9
        %v635 = vpop.permute.xlu0 %634
        %636 = vrot.lane.b32.xlu0 %v628, 9
        %v637 = vpop.permute.xlu0 %636
        %vm638 = vcmask 72704
        %v639 = vsel %vm638, %v635, %v637
        %v641 = vsel %vm631, %v639, 0.0
        %642 = vst [vmem:[#allocation3] sm:$0xff] %v641
        %v643 = vld [vmem:[#allocation2] sm:$0xff]
        %v644 = vld [vmem:[#allocation2 + $0x8] sm:$0xff]
        %v645 = vsel %vm447, 1, 0
        %v646 = vperm.slane %v645, 0
        %vm647 = vcmp.eq.s32.totalorder %v646, 1
        %650 = vrot.lane.b32.xlu0 %v643, 8
        %v651 = vpop.permute.xlu0 %650
        %652 = vrot.lane.b32.xlu0 %v644, 8
        %v653 = vpop.permute.xlu0 %652
        %vm654 = vcmask 64512
        %v655 = vsel %vm654, %v651, %v653
        %v657 = vsel %vm647, %v655, 0.0
        %658 = vst [vmem:[#allocation3 + $0x8] sm:$0xff] %v657
        %v659 = vld [vmem:[#allocation2] sm:$0xff]
        %v660 = vld [vmem:[#allocation2 + $0x8] sm:$0xff]
        %v661 = vsel %vm452, 1, 0
        %v662 = vperm.slane %v661, 0
        %vm663 = vcmp.eq.s32.totalorder %v662, 1
        %666 = vrot.lane.b32.xlu0 %v659, 7
        %v667 = vpop.permute.xlu0 %666
        %668 = vrot.lane.b32.xlu0 %v660, 7
        %v669 = vpop.permute.xlu0 %668
        %vm670 = vcmask 56320
        %v671 = vsel %vm670, %v667, %v669
        %v673 = vsel %vm663, %v671, 0.0
        %674 = vst [vmem:[#allocation3 + $0x10] sm:$0xff] %v673
        %v675 = vld [vmem:[#allocation2] sm:$0xff]
        %v676 = vld [vmem:[#allocation2 + $0x8] sm:$0xff]
        %v677 = vsel %vm445, 1, 0
        %v678 = vperm.slane %v677, 0
        %vm679 = vcmp.eq.s32.totalorder %v678, 1
        %682 = vrot.lane.b32.xlu0 %v675, 1
        %v683 = vpop.permute.xlu0 %682
        %684 = vrot.lane.b32.xlu0 %v676, 1
        %v685 = vpop.permute.xlu0 %684
        %vm686 = vcmask 7168
        %v687 = vsel %vm686, %v683, %v685
        %v689 = vsel %vm679, %v687, 0.0
        %690 = vst [vmem:[#allocation3 + $0x18] sm:$0xff] %v689
        %v691 = vld [vmem:[#allocation2 + $0x8] sm:$0xff]
        %692 = vst [vmem:[#allocation3 + $0x20] sm:$0xff] %v691
        %v693 = vld [vmem:[#allocation2 + $0x8] sm:$0xff]
        %v694 = vld [vmem:[#allocation2 + $0x10] sm:$0xff]
        %v695 = vsel %vm446, 1, 0
        %v696 = vperm.slane %v695, 0
        %vm697 = vcmp.eq.s32.totalorder %v696, 1
        %700 = vrot.lane.b32.xlu0 %v693, 127
        %v701 = vpop.permute.xlu0 %700
        %702 = vrot.lane.b32.xlu0 %v694, 127
        %v703 = vpop.permute.xlu0 %702
        %vm704 = vcmask 1039360
        %v705 = vsel %vm704, %v701, %v703
        %v707 = vsel %vm697, %v705, 0.0
        %708 = vst [vmem:[#allocation3 + $0x28] sm:$0xff] %v707
        %v709 = vld [vmem:[#allocation2 + $0x8] sm:$0xff]
        %v710 = vld [vmem:[#allocation2 + $0x10] sm:$0xff]
        %v711 = vsel %vm453, 1, 0
        %v712 = vperm.slane %v711, 0
        %vm713 = vcmp.eq.s32.totalorder %v712, 1
        %716 = vrot.lane.b32.xlu0 %v709, 121
        %v717 = vpop.permute.xlu0 %716
        %718 = vrot.lane.b32.xlu0 %v710, 121
        %v719 = vpop.permute.xlu0 %718
        %vm720 = vcmask 990208
        %v721 = vsel %vm720, %v717, %v719
        %v723 = vsel %vm713, %v721, 0.0
        %724 = vst [vmem:[#allocation3 + $0x30] sm:$0xff] %v723
        %v725 = vld [vmem:[#allocation2 + $0x8] sm:$0xff]
        %v726 = vld [vmem:[#allocation2 + $0x10] sm:$0xff]
        %v727 = vsel %vm448, 1, 0
        %v728 = vperm.slane %v727, 0
        %vm729 = vcmp.eq.s32.totalorder %v728, 1
        %732 = vrot.lane.b32.xlu0 %v725, 120
        %v733 = vpop.permute.xlu0 %732
        %734 = vrot.lane.b32.xlu0 %v726, 120
        %v735 = vpop.permute.xlu0 %734
        %vm736 = vcmask 982016
        %v737 = vsel %vm736, %v733, %v735
        %v739 = vsel %vm729, %v737, 0.0
        %740 = vst [vmem:[#allocation3 + $0x38] sm:$0xff] %v739
        %v741 = vld [vmem:[#allocation2 + $0x8] sm:$0xff]
        %v742 = vld [vmem:[#allocation2 + $0x10] sm:$0xff]
        %v743 = vsel %vm454, 1, 0
        %v744 = vperm.slane %v743, 0
        %vm745 = vcmp.eq.s32.totalorder %v744, 1
        %748 = vrot.lane.b32.xlu0 %v741, 119
        %v749 = vpop.permute.xlu0 %748
        %750 = vrot.lane.b32.xlu0 %v742, 119
        %v751 = vpop.permute.xlu0 %750
        %vm752 = vcmask 973824
        %v753 = vsel %vm752, %v749, %v751
        %v755 = vsel %vm745, %v753, 0.0
        %756 = vst [vmem:[#allocation3 + $0x40] sm:$0xff] %v755
        %s757 = scalar_lea.vmem %s4, 16
        %v758 = vld [vmem:[%s757] sm:$0xff]
        %v759 = vld [vmem:[%s757 + $0x8] sm:$0xff]
        %v760 = vld [vmem:[#allocation3] sm:$0xff]
        %v761 = vld [vmem:[#allocation3 + $0x8] sm:$0xff]
        %v762 = vld [vmem:[#allocation3 + $0x10] sm:$0xff]
        %v763 = vld [vmem:[#allocation3 + $0x18] sm:$0xff]
        %v764 = vld [vmem:[#allocation3 + $0x20] sm:$0xff]
        %v765 = vld [vmem:[#allocation3 + $0x28] sm:$0xff]
        %v766 = vld [vmem:[#allocation3 + $0x30] sm:$0xff]
        %v767 = vld [vmem:[#allocation3 + $0x38] sm:$0xff]
        %v768 = vld [vmem:[#allocation3 + $0x40] sm:$0xff]
        %v770 = vsel %vm494, %v758, 0
        %v773 = vsel %vm494, %v759, 0
        %775 = vmatpush.msra.mxu0 0.0
        %776 = vmatpush.msra.mxu0 0.0
        %777 = vmatpush.msra.mxu0 0.0
        %778 = vmatpush.msra.mxu0 0.0
        %779 = vmatpush.msra.mxu0 0.0
        %780 = vmatpush.msra.mxu0 0.0
        %781 = vmatpush.msra.mxu0 0.0
        %782 = vmatpush.msra.mxu0 %v768
        %783 = vmatpush.msra.mxu0 %v767
        %784 = vmatpush.msra.mxu0 %v766
        %785 = vmatpush.msra.mxu0 %v765
        %786 = vmatpush.msra.mxu0 %v764
        %787 = vmatpush.msra.mxu0 %v763
        %788 = vmatpush.msra.mxu0 %v762
        %789 = vmatpush.msra.mxu0 %v761
        %790 = vmatpush.msra.mxu0 %v760
        %791 = vmatmul.f32.gmra.mxu0 %v770
        %v792 = vpop.f32.mrf.mxu0
        %v793 = vadd.f32 0.0, %v792
        %794 = vmatmul.f32.gmra.mxu0 %v773
        %v795 = vpop.f32.mrf.mxu0
        %v796 = vadd.f32 0.0, %v795
        %797 = vdwg.mxu0
        %v799 = vsel %vm494, %v616, 0
        %v802 = vsel %vm494, %v617, 0
        %804 = vmatpush.msra.mxu0 0.0
        %805 = vmatpush.msra.mxu0 0.0
        %806 = vmatpush.msra.mxu0 0.0
        %807 = vmatpush.msra.mxu0 0.0
        %808 = vmatpush.msra.mxu0 0.0
        %809 = vmatpush.msra.mxu0 0.0
        %810 = vmatpush.msra.mxu0 0.0
        %811 = vmatpush.msra.mxu0 %v626
        %812 = vmatpush.msra.mxu0 %v625
        %813 = vmatpush.msra.mxu0 %v624
        %814 = vmatpush.msra.mxu0 %v623
        %815 = vmatpush.msra.mxu0 %v622
        %816 = vmatpush.msra.mxu0 %v621
        %817 = vmatpush.msra.mxu0 %v620
        %818 = vmatpush.msra.mxu0 %v619
        %819 = vmatpush.msra.mxu0 %v618
        %820 = vmatmul.f32.gmra.mxu0 %v799
        %v821 = vpop.f32.mrf.mxu0
        %v822 = vadd.f32 %v793, %v821
        %823 = vmatmul.f32.gmra.mxu0 %v802
        %v824 = vpop.f32.mrf.mxu0
        %v825 = vadd.f32 %v796, %v824
        %826 = vdwg.mxu0
        %v827 = vld [vmem:[#allocation2 + $0x8] sm:$0xff]
        %v828 = vld [vmem:[#allocation2 + $0x10] sm:$0xff]
        %vm829 = vmand %vm451, %vm450
        %v830 = vsel %vm829, 1, 0
        %v831 = vperm.slane %v830, 0
        %vm832 = vcmp.eq.s32.totalorder %v831, 1
        %835 = vrot.lane.b32.xlu0 %v827, 73
        %v836 = vpop.permute.xlu0 %835
        %837 = vrot.lane.b32.xlu0 %v828, 73
        %v838 = vpop.permute.xlu0 %837
        %v839 = vsel %vm477, %v836, %v838
        %v841 = vsel %vm832, %v839, 0.0
        %842 = vst [vmem:[#allocation3] sm:$0xff] %v841
        %v843 = vld [vmem:[#allocation2 + $0x8] sm:$0xff]
        %v844 = vld [vmem:[#allocation2 + $0x10] sm:$0xff]
        %vm845 = vmand %vm447, %vm450
        %v846 = vsel %vm845, 1, 0
        %v847 = vperm.slane %v846, 0
        %vm848 = vcmp.eq.s32.totalorder %v847, 1
        %851 = vrot.lane.b32.xlu0 %v843, 72
        %v852 = vpop.permute.xlu0 %851
        %853 = vrot.lane.b32.xlu0 %v844, 72
        %v854 = vpop.permute.xlu0 %853
        %v855 = vsel %vm494, %v852, %v854
        %v857 = vsel %vm848, %v855, 0.0
        %858 = vst [vmem:[#allocation3 + $0x8] sm:$0xff] %v857
        %v859 = vld [vmem:[#allocation2 + $0x8] sm:$0xff]
        %v860 = vld [vmem:[#allocation2 + $0x10] sm:$0xff]
        %vm861 = vmand %vm452, %vm450
        %v862 = vsel %vm861, 1, 0
        %v863 = vperm.slane %v862, 0
        %vm864 = vcmp.eq.s32.totalorder %v863, 1
        %867 = vrot.lane.b32.xlu0 %v859, 71
        %v868 = vpop.permute.xlu0 %867
        %869 = vrot.lane.b32.xlu0 %v860, 71
        %v870 = vpop.permute.xlu0 %869
        %v871 = vsel %vm511, %v868, %v870
        %v873 = vsel %vm864, %v871, 0.0
        %874 = vst [vmem:[#allocation3 + $0x10] sm:$0xff] %v873
        %v875 = vld [vmem:[#allocation2 + $0x8] sm:$0xff]
        %v876 = vld [vmem:[#allocation2 + $0x10] sm:$0xff]
        %vm877 = vmand %vm445, %vm450
        %v878 = vsel %vm877, 1, 0
        %v879 = vperm.slane %v878, 0
        %vm880 = vcmp.eq.s32.totalorder %v879, 1
        %883 = vrot.lane.b32.xlu0 %v875, 65
        %v884 = vpop.permute.xlu0 %883
        %885 = vrot.lane.b32.xlu0 %v876, 65
        %v886 = vpop.permute.xlu0 %885
        %v887 = vsel %vm528, %v884, %v886
        %v889 = vsel %vm880, %v887, 0.0
        %890 = vst [vmem:[#allocation3 + $0x18] sm:$0xff] %v889
        %v891 = vld [vmem:[#allocation2 + $0x8] sm:$0xff]
        %v892 = vld [vmem:[#allocation2 + $0x10] sm:$0xff]
        %v893 = vsel %vm450, 1, 0
        %v894 = vperm.slane %v893, 0
        %vm895 = vcmp.eq.s32.totalorder %v894, 1
        %898 = vrot.lane.b32.xlu0 %v891, 64
        %v899 = vpop.permute.xlu0 %898
        %900 = vrot.lane.b32.xlu0 %v892, 64
        %v901 = vpop.permute.xlu0 %900
        %v902 = vsel %vm455, %v899, %v901
        %v904 = vsel %vm895, %v902, 0.0
        %905 = vst [vmem:[#allocation3 + $0x20] sm:$0xff] %v904
        %v906 = vld [vmem:[#allocation2 + $0x8] sm:$0xff]
        %v907 = vld [vmem:[#allocation2 + $0x10] sm:$0xff]
        %vm908 = vmand %vm446, %vm450
        %v909 = vsel %vm908, 1, 0
        %v910 = vperm.slane %v909, 0
        %vm911 = vcmp.eq.s32.totalorder %v910, 1
        %914 = vrot.lane.b32.xlu0 %v906, 63
        %v915 = vpop.permute.xlu0 %914
        %916 = vrot.lane.b32.xlu0 %v907, 63
        %v917 = vpop.permute.xlu0 %916
        %v918 = vsel %vm560, %v915, %v917
        %v920 = vsel %vm911, %v918, 0.0
        %921 = vst [vmem:[#allocation3 + $0x28] sm:$0xff] %v920
        %v922 = vld [vmem:[#allocation2 + $0x8] sm:$0xff]
        %v923 = vld [vmem:[#allocation2 + $0x10] sm:$0xff]
        %vm924 = vmand %vm453, %vm450
        %v925 = vsel %vm924, 1, 0
        %v926 = vperm.slane %v925, 0
        %vm927 = vcmp.eq.s32.totalorder %v926, 1
        %930 = vrot.lane.b32.xlu0 %v922, 57
        %v931 = vpop.permute.xlu0 %930
        %932 = vrot.lane.b32.xlu0 %v923, 57
        %v933 = vpop.permute.xlu0 %932
        %v934 = vsel %vm577, %v931, %v933
        %v936 = vsel %vm927, %v934, 0.0
        %937 = vst [vmem:[#allocation3 + $0x30] sm:$0xff] %v936
        %v938 = vld [vmem:[#allocation2 + $0x8] sm:$0xff]
        %v939 = vld [vmem:[#allocation2 + $0x10] sm:$0xff]
        %vm940 = vmand %vm448, %vm450
        %v941 = vsel %vm940, 1, 0
        %v942 = vperm.slane %v941, 0
        %vm943 = vcmp.eq.s32.totalorder %v942, 1
        %946 = vrot.lane.b32.xlu0 %v938, 56
        %v947 = vpop.permute.xlu0 %946
        %948 = vrot.lane.b32.xlu0 %v939, 56
        %v949 = vpop.permute.xlu0 %948
        %v950 = vsel %vm594, %v947, %v949
        %v952 = vsel %vm943, %v950, 0.0
        %953 = vst [vmem:[#allocation3 + $0x38] sm:$0xff] %v952
        %v954 = vld [vmem:[#allocation2 + $0x8] sm:$0xff]
        %v955 = vld [vmem:[#allocation2 + $0x10] sm:$0xff]
        %vm956 = vmand %vm454, %vm450
        %v957 = vsel %vm956, 1, 0
        %v958 = vperm.slane %v957, 0
        %vm959 = vcmp.eq.s32.totalorder %v958, 1
        %962 = vrot.lane.b32.xlu0 %v954, 55
        %v963 = vpop.permute.xlu0 %962
        %964 = vrot.lane.b32.xlu0 %v955, 55
        %v965 = vpop.permute.xlu0 %964
        %v966 = vsel %vm611, %v963, %v965
        %v968 = vsel %vm959, %v966, 0.0
        %969 = vst [vmem:[#allocation3 + $0x40] sm:$0xff] %v968
        %s970 = scalar_lea.vmem %s4, 32
        %v971 = vld [vmem:[%s970] sm:$0xff]
        %v972 = vld [vmem:[%s970 + $0x8] sm:$0xff]
        %v973 = vld [vmem:[#allocation3] sm:$0xff]
        %v974 = vld [vmem:[#allocation3 + $0x8] sm:$0xff]
        %v975 = vld [vmem:[#allocation3 + $0x10] sm:$0xff]
        %v976 = vld [vmem:[#allocation3 + $0x18] sm:$0xff]
        %v977 = vld [vmem:[#allocation3 + $0x20] sm:$0xff]
        %v978 = vld [vmem:[#allocation3 + $0x28] sm:$0xff]
        %v979 = vld [vmem:[#allocation3 + $0x30] sm:$0xff]
        %v980 = vld [vmem:[#allocation3 + $0x38] sm:$0xff]
        %v981 = vld [vmem:[#allocation3 + $0x40] sm:$0xff]
        %v983 = vsel %vm494, %v971, 0
        %v986 = vsel %vm494, %v972, 0
        %988 = vmatpush.msra.mxu0 0.0
        %989 = vmatpush.msra.mxu0 0.0
        %990 = vmatpush.msra.mxu0 0.0
        %991 = vmatpush.msra.mxu0 0.0
        %992 = vmatpush.msra.mxu0 0.0
        %993 = vmatpush.msra.mxu0 0.0
        %994 = vmatpush.msra.mxu0 0.0
        %995 = vmatpush.msra.mxu0 %v981
        %996 = vmatpush.msra.mxu0 %v980
        %997 = vmatpush.msra.mxu0 %v979
        %998 = vmatpush.msra.mxu0 %v978
        %999 = vmatpush.msra.mxu0 %v977
        %1000 = vmatpush.msra.mxu0 %v976
        %1001 = vmatpush.msra.mxu0 %v975
        %1002 = vmatpush.msra.mxu0 %v974
        %1003 = vmatpush.msra.mxu0 %v973
        %1004 = vmatmul.f32.gmra.mxu0 %v983
        %v1005 = vpop.f32.mrf.mxu0
        %v1006 = vadd.f32 0.0, %v1005
        %1007 = vmatmul.f32.gmra.mxu0 %v986
        %v1008 = vpop.f32.mrf.mxu0
        %v1009 = vadd.f32 0.0, %v1008
        %1010 = vdwg.mxu0
        %v1011 = vadd.f32 %v822, %v1006
        %v1012 = vadd.f32 %v825, %v1009
        %1013 = vst [vmem:[%s370] sm:$0xff] %v1011
        %1014 = vst [vmem:[%s370 + $0x8] sm:$0xff] %v1012
        %1015 = vadd.xlane.f32.xlu0 %v1011
        %v1016 = vpop.xlane.xlu0 %1015
        %1017 = vadd.xlane.f32.xlu0 %v1012
        %v1018 = vpop.xlane.xlu0 %1017
        %v1021 = vlaneseq
        %v1022 = vand.u32 %v1021, 127
        %v1023 = vperm.slane %v1016, %v1022
        %v1024 = vadd.s32 %v1022, 4294967288
        %v1025 = vperm.slane %v1018, %v1024
        %vm1026 = vcmask 130112
        %v1027 = vsel %vm1026, %v1025, %v1023
        %vm1029 = vcmask 122880
        %1030 = vst.msk [vmem:[%s431] sm:$0x1] %vm1029, %v1027
        %v1031 = vmul.f32 %v1011, %v1011
        %v1032 = vmul.f32 %v1012, %v1012
        %1033 = vadd.xlane.f32.xlu0 %v1031
        %v1034 = vpop.xlane.xlu0 %1033
        %1035 = vadd.xlane.f32.xlu0 %v1032
        %v1036 = vpop.xlane.xlu0 %1035
        %v1039 = vperm.slane %v1034, %v1022
        %v1040 = vperm.slane %v1036, %v1024
        %v1041 = vsel %vm1026, %v1040, %v1039
        %1043 = vst.msk [vmem:[%s438] sm:$0x1] %vm1029, %v1041
        %s1044 = sand.u32 %s179, 1
        %s1045 = sand.u32 %s179, 1
        %s1046 = smul.addr %s1045, 16
        %s1047 = scalar_lea.vmem [#allocation4], %s1046
        %p1048 = scmp.lt.s32.totalorder %s23, 1
        %s1049 = scalar_select %p1048, %s23, 1
        %p1050 = scmp.lt.s32.totalorder %s24, 3
        %s1051 = scalar_select %p1050, %s24, 3
        %s1052 = smul.addr %s1049, 4
        %s1053 = sadd.s32 %s1051, %s1052
        %s1054 = scalar_lea.vmem %s6, %s1053
        %p1055 = scmp.lt.s32.totalorder %s23, 1
        %s1056 = scalar_select %p1055, %s23, 1
        %p1057 = scmp.lt.s32.totalorder %s24, 3
        %s1058 = scalar_select %p1057, %s24, 3
        %s1059 = smul.addr %s1056, 4
        %s1060 = sadd.s32 %s1058, %s1059
        %s1061 = scalar_lea.vmem %s7, %s1060
        // Predicated region
        $region41: #{conv_bn_relu_3d.2} parent=39 // pred_check
          %p1062 = pneg %p189
        $region42: #{conv_bn_relu_3d.2} parent=39 // pred_check_branch
          %1064 = sbr.rel (%p1062) target = $region44
        $region43: #{conv_bn_relu_3d.2} parent=39 // pred_region
          %s1065 = smul.addr %s23, 8
          %s1066 = sadd.s32 %s24, %s1065
          %s1067 = smul.addr %s1066, 8
          %s1068 = scalar_lea.vmem %s5, %s1067
          // Predicated region
          $region45: #{conv_bn_relu_3d.2} parent=43 // pred_check
            _
          $region46: #{conv_bn_relu_3d.2} parent=43 // pred_check_branch
            %1070 = sbr.rel (0) target = $region48
          $region47: #{conv_bn_relu_3d.2} parent=43 // pred_region
            // Predicated region
            $region49: #{conv_bn_relu_3d.2} parent=47 // pred_check
              _
            $region50: #{conv_bn_relu_3d.2} parent=47 // pred_check_branch
              %1072 = sbr.rel (0) target = $region52
            $region51: #{conv_bn_relu_3d.2} parent=47 // pred_region
              // Predicated region
              $region64: #{conv_bn_relu_3d.2} parent=51 // pred_check
                _
              $region65: #{conv_bn_relu_3d.2} parent=51 // pred_check_branch
                %1090 = sbr.rel (0) target = $region67
              $region66: #{conv_bn_relu_3d.2} parent=51 // pred_region
                loop: start=0, step=1, limit=1
                $region68: #{conv_bn_relu_3d.2} parent=66 // loop_pre_header
                  _
                $region69: #{conv_bn_relu_3d.2} parent=66 // loop_header
                  %s1092 = sphi 0, %s1096
                  %p1093 = scmp.ge.s32.totalorder %s1092, 1
                  %s1097 = sphi %s1047, %s1047
                  %s1098 = sphi %s1068, %s1068
                $region70: #{conv_bn_relu_3d.2} parent=66 // loop_header_branch
                  %1095 = sbr.rel (%p1093) target = $region74
                $region71: #{conv_bn_relu_3d.2} parent=66 // loop_body
                  %v1099 = vld [vmem:[%s1097] sm:$0xff]
                  %1100 = vst [vmem:[%s1098] sm:$0xff] %v1099
                  %v1101 = vld [vmem:[%s1097 + $0x8] sm:$0xff]
                  %1102 = vst [vmem:[%s1098 + $0x20] sm:$0xff] %v1101
                $region72: #{conv_bn_relu_3d.2} parent=66 // loop_footer
                  %s1096 = sadd.s32 1, %s1092
                $region73: #{conv_bn_relu_3d.2} parent=66 // loop_footer_branch
                  %1091 = sbr.rel target = $region69
                $region74: #{conv_bn_relu_3d.2} parent=66 // loop_exit
                  _
              $region67: #{conv_bn_relu_3d.2} parent=51 // pred_fallthru
                _
              // Predicated region
              $region75: #{conv_bn_relu_3d.2} parent=51 // pred_check
                _
              $region76: #{conv_bn_relu_3d.2} parent=51 // pred_check_branch
                %1104 = sbr.rel target = $region78
              $region77: #{conv_bn_relu_3d.2} parent=51 // pred_region
                _
              $region78: #{conv_bn_relu_3d.2} parent=51 // pred_fallthru
                _
            $region52: #{conv_bn_relu_3d.2} parent=47 // pred_fallthru
              _
            // Predicated region
            $region53: #{conv_bn_relu_3d.2} parent=47 // pred_check
              _
            $region54: #{conv_bn_relu_3d.2} parent=47 // pred_check_branch
              %1074 = sbr.rel target = $region56
            $region55: #{conv_bn_relu_3d.2} parent=47 // pred_region
              %s1076 = ssub.s32 256, 1
              loop: start=0, step=1, limit=1
              $region57: #{conv_bn_relu_3d.2} parent=55 // loop_pre_header
                _
              $region58: #{conv_bn_relu_3d.2} parent=55 // loop_header
                %s1078 = sphi 0, %s1082
                %p1079 = scmp.ge.s32.totalorder %s1078, 1
                %s1083 = sphi %s1047, %s1047
                %s1084 = sphi %s1068, %s1068
              $region59: #{conv_bn_relu_3d.2} parent=55 // loop_header_branch
                %1081 = sbr.rel (%p1079) target = $region63
              $region60: #{conv_bn_relu_3d.2} parent=55 // loop_body
                %v1085 = vld [vmem:[%s1083] sm:%s1076]
                %1086 = vst [vmem:[%s1084] sm:%s1076] %v1085
                %v1087 = vld [vmem:[%s1083 + $0x8] sm:%s1076]
                %1088 = vst [vmem:[%s1084 + $0x20] sm:%s1076] %v1087
              $region61: #{conv_bn_relu_3d.2} parent=55 // loop_footer
                %s1082 = sadd.s32 1, %s1078
              $region62: #{conv_bn_relu_3d.2} parent=55 // loop_footer_branch
                %1077 = sbr.rel target = $region58
              $region63: #{conv_bn_relu_3d.2} parent=55 // loop_exit
                _
            $region56: #{conv_bn_relu_3d.2} parent=47 // pred_fallthru
              _
          $region48: #{conv_bn_relu_3d.2} parent=43 // pred_fallthru
            _
          %1105 = vnop
        $region44: #{conv_bn_relu_3d.2} parent=39 // pred_fallthru
          _
        // Predicated region
        $region79: #{conv_bn_relu_3d.2} parent=39 // pred_check
          %p1106 = pneg %p217
        $region80: #{conv_bn_relu_3d.2} parent=39 // pred_check_branch
          %1108 = sbr.rel (%p1106) target = $region82
        $region81: #{conv_bn_relu_3d.2} parent=39 // pred_region
          _
        $region82: #{conv_bn_relu_3d.2} parent=39 // pred_fallthru
          _
        // Predicated region
        $region83: #{conv_bn_relu_3d.2} parent=39 // pred_check
          %p1109 = pneg %p245
        $region84: #{conv_bn_relu_3d.2} parent=39 // pred_check_branch
          %1111 = sbr.rel (%p1109) target = $region86
        $region85: #{conv_bn_relu_3d.2} parent=39 // pred_region
          _
        $region86: #{conv_bn_relu_3d.2} parent=39 // pred_fallthru
          _
      $region40: #{conv_bn_relu_3d.2} parent=5 // pred_fallthru
        _
      %p1112 = scmp.le.s32.totalorder 2, %s14
      // Predicated region
      $region87: #{conv_bn_relu_3d.2} parent=5 // pred_check
        %p1113 = pneg %p1112
      $region88: #{conv_bn_relu_3d.2} parent=5 // pred_check_branch
        %1115 = sbr.rel (%p1113) target = $region90
      $region89: #{conv_bn_relu_3d.2} parent=5 // pred_region
        %s1116 = ssub.s32 %s14, 2
        // Predicated region
        $region91: #{conv_bn_relu_3d.2} parent=89 // pred_check
          %p1117 = pneg %p195
        $region92: #{conv_bn_relu_3d.2} parent=89 // pred_check_branch
          %1119 = sbr.rel (%p1117) target = $region94
        $region93: #{conv_bn_relu_3d.2} parent=89 // pred_region
          %s1120 = sand.u32 %s180, 1
          %s1121 = sand.u32 %s180, 1
          %s1122 = smul.addr %s1121, 16
          %s1123 = scalar_lea.vmem [#allocation4], %s1122
        $region94: #{conv_bn_relu_3d.2} parent=89 // pred_fallthru
          _
        // Predicated region
        $region95: #{conv_bn_relu_3d.2} parent=89 // pred_check
          %p1124 = pneg %p223
        $region96: #{conv_bn_relu_3d.2} parent=89 // pred_check_branch
          %1126 = sbr.rel (%p1124) target = $region98
        $region97: #{conv_bn_relu_3d.2} parent=89 // pred_region
          %p1127 = scmp.lt.s32.totalorder %s25, 1
          %s1128 = scalar_select %p1127, %s25, 1
          %p1129 = scmp.lt.s32.totalorder %s26, 3
          %s1130 = scalar_select %p1129, %s26, 3
          %s1131 = smul.addr %s1128, 4
          %s1132 = sadd.s32 %s1130, %s1131
          %s1133 = scalar_lea.vmem %s6, %s1132
        $region98: #{conv_bn_relu_3d.2} parent=89 // pred_fallthru
          _
        // Predicated region
        $region99: #{conv_bn_relu_3d.2} parent=89 // pred_check
          %p1134 = pneg %p251
        $region100: #{conv_bn_relu_3d.2} parent=89 // pred_check_branch
          %1136 = sbr.rel (%p1134) target = $region102
        $region101: #{conv_bn_relu_3d.2} parent=89 // pred_region
          %p1137 = scmp.lt.s32.totalorder %s25, 1
          %s1138 = scalar_select %p1137, %s25, 1
          %p1139 = scmp.lt.s32.totalorder %s26, 3
          %s1140 = scalar_select %p1139, %s26, 3
          %s1141 = smul.addr %s1138, 4
          %s1142 = sadd.s32 %s1140, %s1141
          %s1143 = scalar_lea.vmem %s7, %s1142
        $region102: #{conv_bn_relu_3d.2} parent=89 // pred_fallthru
          _
      $region90: #{conv_bn_relu_3d.2} parent=5 // pred_fallthru
        _
    $region6: #{conv_bn_relu_3d.2} parent=1 // loop_footer
      %s18 = sadd.s32 1, %s14
    $region7: #{conv_bn_relu_3d.2} parent=1 // loop_footer_branch
      %13 = sbr.rel target = $region3
    $region8: #{conv_bn_relu_3d.2} parent=1 // loop_exit
      _

</llo_original>
